<compile_context>
chip_gen: v7x
topology: tpu7x:2x2x1
jax: 0.10.0
libtpu: 0.0.40
codegen_flags: <defaults>
</compile_context>

<pallas_src>
import functools

import jax
import jax.numpy as jnp
from jax.experimental import pallas as pl
from jax.experimental.pallas import tpu as pltpu


# ----------------------------------------------------------------------------
# Fused Pallas kernel
# ----------------------------------------------------------------------------
def _make_fused_kernel(tile_n, n_tokens, c):
    """Fused: (folded enc+quant_conv) -> gaussian sample/KL -> (folded pqc+dec)."""

    def kernel(x_ref, eps_ref, wm_ref, bm_ref, wl_ref, bl_ref, wd_ref, bd_ref,
               dec_ref, kl_ref):
        x = x_ref[...]                                           # [tn, Dp] bf16

        # quant_conv moments, mean / logvar produced by separate (folded)
        # weight matrices -> no lane-dim split inside the kernel.
        mean = (jnp.dot(x, wm_ref[...], preferred_element_type=jnp.float32)
                + bm_ref[...])                                   # [tn, Cd] f32
        logvar = (jnp.dot(x, wl_ref[...], preferred_element_type=jnp.float32)
                  + bl_ref[...])
        logvar = jnp.clip(logvar, -30.0, 20.0)

        # DiagonalGaussianDistribution.sample() + kl()
        std = jnp.exp(0.5 * logvar)                              # single EUP exp
        var = std * std                                          # reuse (no 2nd exp)
        z = mean + std * eps_ref[...]

        kl = 0.5 * (mean * mean + var - 1.0 - logvar)            # [tn, Cd]
        # Mask rows past the true token count (padded last tile).
        row = (pl.program_id(0) * tile_n
               + jax.lax.broadcasted_iota(jnp.int32, kl.shape, 0))
        kl = jnp.where(row < n_tokens, kl, 0.0)
        # Per-tile scalar KL, stored as a dense (1, 8, 128) block (unmasked vst).
        kl_ref[...] = jnp.broadcast_to(jnp.sum(kl), kl_ref.shape)

        # post_quant_conv + decoder stub (folded): z @ Wd + bd
        dec = (jnp.dot(z.astype(wd_ref.dtype), wd_ref[...],
                       preferred_element_type=jnp.float32) + bd_ref[...])
        dec_ref[...] = dec

    return kernel


def _round_up(x, m):
    return ((x + m - 1) // m) * m


# ----------------------------------------------------------------------------
# Parameters
# ----------------------------------------------------------------------------
def init_params(key, *, in_ch=3, patch=16, z_channels=64, embed_dim=8):
    """Deterministic synthetic parameter init (shapes match the module)."""
    ks = jax.random.split(key, 8)
    d_patch = in_ch * patch * patch
    scale = 0.02

    def w(k, shape):
        return scale * jax.random.normal(k, shape, dtype=jnp.float32)

    return {
        # encoder stub (patchify linear)  -- TODO(synk): full llamagen Encoder
        "enc_w": w(ks[0], (d_patch, z_channels)),
        "enc_b": w(ks[4], (z_channels,)),
        # quant_conv: Conv2d(z_channels, 2*embed_dim, 1)
        "qc_w": w(ks[1], (z_channels, 2 * embed_dim)),
        "qc_b": w(ks[5], (2 * embed_dim,)),
        # post_quant_conv: Conv2d(embed_dim, z_channels, 1)
        "pqc_w": w(ks[2], (embed_dim, z_channels)),
        "pqc_b": w(ks[6], (z_channels,)),
        # decoder stub (un-patchify linear) -- TODO(synk): full llamagen Decoder
        "dec_w": w(ks[3], (z_channels, d_patch)),
        "dec_b": w(ks[7], (d_patch,)),
    }


# ----------------------------------------------------------------------------
# Forward pass (single fused pallas_call)
# ----------------------------------------------------------------------------
@functools.partial(jax.jit,
                   static_argnames=("patch", "kl_loss_weight", "tile_n"))
def kl_model_forward(x_nchw, params, noise_key, *, patch=16,
                     kl_loss_weight=1e-6, tile_n=512):
    """Mirrors KLModel.forward(input, sample_posterior=True)."""
    bsz, c_in, height, width = x_nchw.shape
    hp, wp = height // patch, width // patch
    seq = hp * wp
    n = bsz * seq
    d_patch = c_in * patch * patch
    c = params["pqc_w"].shape[0]                # codebook_embed_dim

    # ---- patchify NCHW -> tokens [n, d_patch] (XLA glue) ----
    x_tok = (x_nchw.reshape(bsz, c_in, hp, patch, wp, patch)
             .transpose(0, 2, 4, 1, 3, 5)
             .reshape(n, d_patch))

    # ---- trace-time weight folding (free; params are tiny) ----
    # moments = (x @ enc_w + enc_b) @ qc_w + qc_b = x @ W1 + b1
    w1 = params["enc_w"] @ params["qc_w"]                       # [Dp, 2*Cd]
    b1 = params["enc_b"] @ params["qc_w"] + params["qc_b"]      # [2*Cd]
    # dec = (z @ pqc_w + pqc_b) @ dec_w + dec_b = z @ W2 + b2
    w2 = params["pqc_w"] @ params["dec_w"]                      # [Cd, Dp]
    b2 = params["pqc_b"] @ params["dec_w"] + params["dec_b"]    # [Dp]

    wm = w1[:, :c].astype(jnp.bfloat16)
    wl = w1[:, c:].astype(jnp.bfloat16)
    bm = b1[:c].reshape(1, c).astype(jnp.float32)
    bl = b1[c:].reshape(1, c).astype(jnp.float32)
    wd = w2.astype(jnp.bfloat16)
    bd = b2.reshape(1, d_patch).astype(jnp.float32)

    # ---- tile sizing: big row tiles, capped by an explicit VMEM budget ----
    vmem_budget = 24 * 1024 * 1024            # stay well under v7x's 64 MiB
    bytes_per_row = 2 * (d_patch * 2 + c * 4 + d_patch * 4 + c * 4)  # dbl-buffered
    row_cap = max(8, (vmem_budget // bytes_per_row) // 8 * 8)
    tn = min(int(tile_n), row_cap, _round_up(n, 8))
    tn = max(8, _round_up(tn, 8))
    num_tiles = pl.cdiv(n, tn)
    n_pad = num_tiles * tn

    # ---- noise + zero-pad tokens to a whole number of tiles ----
    eps = jax.random.normal(noise_key, (n, c), dtype=jnp.float32)
    x_pad = jnp.zeros((n_pad, d_patch), jnp.bfloat16)
    x_pad = x_pad.at[:n].set(x_tok.astype(jnp.bfloat16))
    eps_pad = jnp.zeros((n_pad, c), jnp.float32).at[:n].set(eps)

    kernel = _make_fused_kernel(tn, n, c)
    dec_tok, kl_part = pl.pallas_call(
        kernel,
        out_shape=(
            jax.ShapeDtypeStruct((n_pad, d_patch), jnp.float32),
            jax.ShapeDtypeStruct((num_tiles, 8, 128), jnp.float32),
        ),
        grid=(num_tiles,),
        in_specs=[
            pl.BlockSpec((tn, d_patch), lambda i: (i, 0)),      # x tokens (bf16)
            pl.BlockSpec((tn, c), lambda i: (i, 0)),            # eps (f32)
            pl.BlockSpec((d_patch, c), lambda i: (0, 0)),       # W_mean (bf16)
            pl.BlockSpec((1, c), lambda i: (0, 0)),             # b_mean
            pl.BlockSpec((d_patch, c), lambda i: (0, 0)),       # W_logvar (bf16)
            pl.BlockSpec((1, c), lambda i: (0, 0)),             # b_logvar
            pl.BlockSpec((c, d_patch), lambda i: (0, 0)),       # W_dec (bf16)
            pl.BlockSpec((1, d_patch), lambda i: (0, 0)),       # b_dec
        ],
        out_specs=(
            pl.BlockSpec((tn, d_patch), lambda i: (i, 0)),      # decoded tokens
            pl.BlockSpec((1, 8, 128), lambda i: (i, 0, 0)),     # per-tile KL sum
        ),
        compiler_params=pltpu.CompilerParams(
            dimension_semantics=("parallel",),                  # v7x 2-TC sharding
            vmem_limit_bytes=32 * 1024 * 1024,
        ),
    )(x_pad, eps_pad, wm, bm, wl, bl, wd, bd)

    # ---- un-patchify back to NCHW (crop padded rows) ----
    dec = (dec_tok[:n]
           .reshape(bsz, hp, wp, c_in, patch, patch)
           .transpose(0, 3, 1, 4, 2, 5)
           .reshape(bsz, c_in, height, width))

    # ---- kl_loss = sum(kl) / B ; diff tuple ----
    kl_loss = jnp.sum(kl_part[:, 0, 0]) / bsz
    diff = (
        kl_loss * kl_loss_weight,
        jnp.array(0.0, jnp.float32),
        jnp.array(0.0, jnp.float32),
        jnp.array(0.0, jnp.float32),
    )
    return dec, diff, None


# ----------------------------------------------------------------------------
# Pure-JAX f32 reference (unfused, unfolded) for correctness checking
# ----------------------------------------------------------------------------
def kl_model_reference(x_nchw, params, noise_key, *, patch=16,
                       kl_loss_weight=1e-6):
    bsz, c_in, height, width = x_nchw.shape
    hp, wp = height // patch, width // patch
    n = bsz * hp * wp
    d_patch = c_in * patch * patch
    c = params["pqc_w"].shape[0]

    x_tok = (x_nchw.reshape(bsz, c_in, hp, patch, wp, patch)
             .transpose(0, 2, 4, 1, 3, 5)
             .reshape(n, d_patch)).astype(jnp.float32)
    h = x_tok @ params["enc_w"] + params["enc_b"]
    moments = h @ params["qc_w"] + params["qc_b"]
    mean = moments[:, :c]
    logvar = jnp.clip(moments[:, c:], -30.0, 20.0)
    std = jnp.exp(0.5 * logvar)
    eps = jax.random.normal(noise_key, (n, c), dtype=jnp.float32)
    z = mean + std * eps
    z_post = z @ params["pqc_w"] + params["pqc_b"]
    dec_tok = z_post @ params["dec_w"] + params["dec_b"]
    dec = (dec_tok.reshape(bsz, hp, wp, c_in, patch, patch)
           .transpose(0, 3, 1, 4, 2, 5)
           .reshape(bsz, c_in, height, width))
    kl = 0.5 * jnp.sum(mean * mean + jnp.exp(logvar) - 1.0 - logvar)
    return dec, (kl / bsz) * kl_loss_weight


# ----------------------------------------------------------------------------
# Demo
# ----------------------------------------------------------------------------
if __name__ == "__main__":
    key = jax.random.PRNGKey(0)
    k_param, k_input, k_noise = jax.random.split(key, 3)

    # B=2, 3x80x80 image, patch 16 -> 5x5 latent grid -> 50 tokens
    # (50 is not a multiple of 8, so the padded/masked KL path is exercised)
    B, C, H, W = 2, 3, 80, 80
    x = jax.random.normal(k_input, (B, C, H, W), dtype=jnp.float32)
    params = init_params(k_param, in_ch=C, patch=16, z_channels=64, embed_dim=8)

    # default large row tile (single-tile grid at this size)
    dec, diff, info = kl_model_forward(x, params, k_noise, patch=16,
                                       kl_loss_weight=1e-6, tile_n=512)
    jax.block_until_ready(dec)
    jax.block_until_ready(diff[0])

    # small tile -> multi-step grid + partial-KL accumulation path
    dec2, diff2, _ = kl_model_forward(x, params, k_noise, patch=16,
                                      kl_loss_weight=1e-6, tile_n=16)
    jax.block_until_ready(dec2)

    dec_ref, kl_ref = kl_model_reference(x, params, k_noise, patch=16,
                                         kl_loss_weight=1e-6)

    assert dec.shape == (B, C, H, W) and dec.dtype == jnp.float32
    assert len(diff) == 4 and info is None

    def rel(a, b):
        return float(jnp.max(jnp.abs(a - b)) / (jnp.max(jnp.abs(b)) + 1e-8))

    # bf16-matmul vs f32 reference tolerance
    assert rel(dec, dec_ref) < 5e-2, rel(dec, dec_ref)
    kr = float(kl_ref)
    assert abs(float(diff[0]) - kr) <= 5e-2 * abs(kr) + 1e-12
    # tiling-invariance between the two tile sizes
    assert rel(dec2, dec) < 1e-4
    assert abs(float(diff2[0]) - float(diff[0])) <= 1e-4 * abs(float(diff[0])) + 1e-12

    print("KERNEL_OK")
</pallas_src>

<mosaic_0001>
module attributes {stable_mosaic.version = 11 : i64} {
  func.func @kernel(%arg0: i32, %arg1: memref<56x768xbf16, #tpu.memory_space<vmem>>, %arg2: memref<56x8xf32, #tpu.memory_space<vmem>>, %arg3: memref<768x8xbf16, #tpu.memory_space<vmem>>, %arg4: memref<1x8xf32, #tpu.memory_space<vmem>>, %arg5: memref<768x8xbf16, #tpu.memory_space<vmem>>, %arg6: memref<1x8xf32, #tpu.memory_space<vmem>>, %arg7: memref<8x768xbf16, #tpu.memory_space<vmem>>, %arg8: memref<1x768xf32, #tpu.memory_space<vmem>>, %arg9: memref<56x768xf32, #tpu.memory_space<vmem>>, %arg10: memref<1x8x128xf32, #tpu.memory_space<vmem>>) attributes {dimension_semantics = [#tpu.dimension_semantics<parallel>], iteration_bounds = array<i64: 1>, scalar_prefetch = 0 : i64, scratch_operands = 0 : i64, tpu.core_type = #tpu.core_type<tc>, window_params = [{transform_indices = @transform_0, window_bounds = array<i64: 56, 768>}, {transform_indices = @transform_1, window_bounds = array<i64: 56, 8>}, {pipeline_mode = #tpu.pipeline_mode<synchronous>, transform_indices = @transform_2, window_bounds = array<i64: 768, 8>}, {pipeline_mode = #tpu.pipeline_mode<synchronous>, transform_indices = @transform_3, window_bounds = array<i64: 1, 8>}, {pipeline_mode = #tpu.pipeline_mode<synchronous>, transform_indices = @transform_4, window_bounds = array<i64: 768, 8>}, {pipeline_mode = #tpu.pipeline_mode<synchronous>, transform_indices = @transform_5, window_bounds = array<i64: 1, 8>}, {pipeline_mode = #tpu.pipeline_mode<synchronous>, transform_indices = @transform_6, window_bounds = array<i64: 8, 768>}, {pipeline_mode = #tpu.pipeline_mode<synchronous>, transform_indices = @transform_7, window_bounds = array<i64: 1, 768>}, {transform_indices = @transform_8, window_bounds = array<i64: 56, 768>}, {transform_indices = @transform_9, window_bounds = array<i64: 1, 8, 128>}]} {
    %c0 = arith.constant 0 : index
    %c0_0 = arith.constant 0 : index
    %0 = vector.load %arg1[%c0, %c0_0] : memref<56x768xbf16, #tpu.memory_space<vmem>>, vector<56x768xbf16>
    %c0_1 = arith.constant 0 : index
    %c0_2 = arith.constant 0 : index
    %1 = vector.load %arg3[%c0_1, %c0_2] : memref<768x8xbf16, #tpu.memory_space<vmem>>, vector<768x8xbf16>
    %cst = arith.constant dense<0.000000e+00> : vector<56x8xf32>
    %2 = tpu.matmul %0, %1, %cst {dimension_numbers = #tpu.dot_dimension_numbers<[1], [0], [0], [1], [0, 0, 1, 1], [], []>} : vector<56x768xbf16>, vector<768x8xbf16>, vector<56x8xf32> -> vector<56x8xf32>
    %c0_3 = arith.constant 0 : index
    %c0_4 = arith.constant 0 : index
    %3 = vector.load %arg4[%c0_3, %c0_4] : memref<1x8xf32, #tpu.memory_space<vmem>>, vector<1x8xf32>
    %4 = vector.broadcast %3 : vector<1x8xf32> to vector<56x8xf32>
    %5 = arith.addf %2, %4 : vector<56x8xf32>
    %c0_5 = arith.constant 0 : index
    %c0_6 = arith.constant 0 : index
    %6 = vector.load %arg5[%c0_5, %c0_6] : memref<768x8xbf16, #tpu.memory_space<vmem>>, vector<768x8xbf16>
    %cst_7 = arith.constant dense<0.000000e+00> : vector<56x8xf32>
    %7 = tpu.matmul %0, %6, %cst_7 {dimension_numbers = #tpu.dot_dimension_numbers<[1], [0], [0], [1], [0, 0, 1, 1], [], []>} : vector<56x768xbf16>, vector<768x8xbf16>, vector<56x8xf32> -> vector<56x8xf32>
    %c0_8 = arith.constant 0 : index
    %c0_9 = arith.constant 0 : index
    %8 = vector.load %arg6[%c0_8, %c0_9] : memref<1x8xf32, #tpu.memory_space<vmem>>, vector<1x8xf32>
    %9 = vector.broadcast %8 : vector<1x8xf32> to vector<56x8xf32>
    %10 = arith.addf %7, %9 : vector<56x8xf32>
    %cst_10 = arith.constant -3.000000e+01 : f32
    %cst_11 = arith.constant 2.000000e+01 : f32
    %11 = vector.broadcast %cst_10 : f32 to vector<56x8xf32>
    %12 = arith.maximumf %11, %10 : vector<56x8xf32>
    %13 = vector.broadcast %cst_11 : f32 to vector<56x8xf32>
    %14 = arith.minimumf %13, %12 : vector<56x8xf32>
    %cst_12 = arith.constant 5.000000e-01 : f32
    %15 = vector.broadcast %cst_12 : f32 to vector<56x8xf32>
    %16 = arith.mulf %15, %14 : vector<56x8xf32>
    %17 = math.exp %16 : vector<56x8xf32>
    %18 = arith.mulf %17, %17 : vector<56x8xf32>
    %c0_13 = arith.constant 0 : index
    %c0_14 = arith.constant 0 : index
    %19 = vector.load %arg2[%c0_13, %c0_14] : memref<56x8xf32, #tpu.memory_space<vmem>>, vector<56x8xf32>
    %20 = arith.mulf %17, %19 : vector<56x8xf32>
    %21 = arith.addf %5, %20 : vector<56x8xf32>
    %22 = arith.mulf %5, %5 : vector<56x8xf32>
    %23 = arith.addf %22, %18 : vector<56x8xf32>
    %cst_15 = arith.constant 1.000000e+00 : f32
    %24 = vector.broadcast %cst_15 : f32 to vector<56x8xf32>
    %25 = arith.subf %23, %24 : vector<56x8xf32>
    %26 = arith.subf %25, %14 : vector<56x8xf32>
    %cst_16 = arith.constant 5.000000e-01 : f32
    %27 = vector.broadcast %cst_16 : f32 to vector<56x8xf32>
    %28 = arith.mulf %27, %26 : vector<56x8xf32>
    %c56_i32 = arith.constant 56 : i32
    %29 = arith.muli %arg0, %c56_i32 : i32
    %30 = tpu.iota {dimensions = array<i32: 0>} : vector<56x8xi32>
    %31 = vector.broadcast %29 : i32 to vector<56x8xi32>
    %32 = arith.addi %31, %30 : vector<56x8xi32>
    %c50_i32 = arith.constant 50 : i32
    %33 = vector.broadcast %c50_i32 : i32 to vector<56x8xi32>
    %34 = arith.cmpi slt, %32, %33 : vector<56x8xi32>
    %cst_17 = arith.constant 0.000000e+00 : f32
    %35 = vector.broadcast %cst_17 : f32 to vector<56x8xf32>
    %36 = arith.select %34, %28, %35 : vector<56x8xi1>, vector<56x8xf32>
    %37 = vector.shape_cast %36 : vector<56x8xf32> to vector<1x56x8xf32>
    %cst_18 = arith.constant dense<0.000000e+00> : vector<1xf32>
    %38 = vector.multi_reduction <add>, %37, %cst_18 [1, 2] : vector<1x56x8xf32> to vector<1xf32>
    %39 = vector.shape_cast %38 : vector<1xf32> to vector<1x1x1xf32>
    %40 = vector.extract %39[0, 0, 0] : f32 from vector<1x1x1xf32>
    %41 = vector.broadcast %40 : f32 to vector<1x8x128xf32>
    %c0_19 = arith.constant 0 : index
    %c0_20 = arith.constant 0 : index
    %c0_21 = arith.constant 0 : index
    %42 = vector.load %arg10[%c0_19, %c0_20, %c0_21] : memref<1x8x128xf32, #tpu.memory_space<vmem>>, vector<1x8x128xf32>
    tpu.vector_store %arg10[%c0_19, %c0_20, %c0_21], %41 {strides = array<i32>} : memref<1x8x128xf32, #tpu.memory_space<vmem>>, vector<1x8x128xf32>,
    %43 = arith.truncf %21 : vector<56x8xf32> to vector<56x8xbf16>
    %c0_22 = arith.constant 0 : index
    %c0_23 = arith.constant 0 : index
    %44 = vector.load %arg7[%c0_22, %c0_23] : memref<8x768xbf16, #tpu.memory_space<vmem>>, vector<8x768xbf16>
    %cst_24 = arith.constant dense<0.000000e+00> : vector<56x768xf32>
    %45 = tpu.matmul %43, %44, %cst_24 {dimension_numbers = #tpu.dot_dimension_numbers<[1], [0], [0], [1], [0, 0, 1, 1], [], []>} : vector<56x8xbf16>, vector<8x768xbf16>, vector<56x768xf32> -> vector<56x768xf32>
    %c0_25 = arith.constant 0 : index
    %c0_26 = arith.constant 0 : index
    %46 = vector.load %arg8[%c0_25, %c0_26] : memref<1x768xf32, #tpu.memory_space<vmem>>, vector<1x768xf32>
    %47 = vector.broadcast %46 : vector<1x768xf32> to vector<56x768xf32>
    %48 = arith.addf %45, %47 : vector<56x768xf32>
    %c0_27 = arith.constant 0 : index
    %c0_28 = arith.constant 0 : index
    %49 = vector.load %arg9[%c0_27, %c0_28] : memref<56x768xf32, #tpu.memory_space<vmem>>, vector<56x768xf32>
    tpu.vector_store %arg9[%c0_27, %c0_28], %48 {strides = array<i32>} : memref<56x768xf32, #tpu.memory_space<vmem>>, vector<56x768xf32>,
    return
  }
  func.func @transform_0(%arg0: i32) -> (i32, i32) {
    %c0_i32 = arith.constant 0 : i32
    %c0_i32_0 = arith.constant 0 : i32
    return %arg0, %c0_i32 : i32, i32
  }
  func.func @transform_1(%arg0: i32) -> (i32, i32) {
    %c0_i32 = arith.constant 0 : i32
    %c0_i32_0 = arith.constant 0 : i32
    return %arg0, %c0_i32 : i32, i32
  }
  func.func @transform_2(%arg0: i32) -> (i32, i32) {
    %c0_i32 = arith.constant 0 : i32
    %c0_i32_0 = arith.constant 0 : i32
    %c0_i32_1 = arith.constant 0 : i32
    return %c0_i32, %c0_i32_0 : i32, i32
  }
  func.func @transform_3(%arg0: i32) -> (i32, i32) {
    %c0_i32 = arith.constant 0 : i32
    %c0_i32_0 = arith.constant 0 : i32
    %c0_i32_1 = arith.constant 0 : i32
    return %c0_i32, %c0_i32_0 : i32, i32
  }
  func.func @transform_4(%arg0: i32) -> (i32, i32) {
    %c0_i32 = arith.constant 0 : i32
    %c0_i32_0 = arith.constant 0 : i32
    %c0_i32_1 = arith.constant 0 : i32
    return %c0_i32, %c0_i32_0 : i32, i32
  }
  func.func @transform_5(%arg0: i32) -> (i32, i32) {
    %c0_i32 = arith.constant 0 : i32
    %c0_i32_0 = arith.constant 0 : i32
    %c0_i32_1 = arith.constant 0 : i32
    return %c0_i32, %c0_i32_0 : i32, i32
  }
  func.func @transform_6(%arg0: i32) -> (i32, i32) {
    %c0_i32 = arith.constant 0 : i32
    %c0_i32_0 = arith.constant 0 : i32
    %c0_i32_1 = arith.constant 0 : i32
    return %c0_i32, %c0_i32_0 : i32, i32
  }
  func.func @transform_7(%arg0: i32) -> (i32, i32) {
    %c0_i32 = arith.constant 0 : i32
    %c0_i32_0 = arith.constant 0 : i32
    %c0_i32_1 = arith.constant 0 : i32
    return %c0_i32, %c0_i32_0 : i32, i32
  }
  func.func @transform_8(%arg0: i32) -> (i32, i32) {
    %c0_i32 = arith.constant 0 : i32
    %c0_i32_0 = arith.constant 0 : i32
    return %arg0, %c0_i32 : i32, i32
  }
  func.func @transform_9(%arg0: i32) -> (i32, i32, i32) {
    %c0_i32 = arith.constant 0 : i32
    %c0_i32_0 = arith.constant 0 : i32
    %c0_i32_1 = arith.constant 0 : i32
    return %arg0, %c0_i32, %c0_i32_0 : i32, i32, i32
  }
}

</mosaic_0001>

<llo_original>
// kernel: kl_model_forward.1
$region0: #{kl_model_forward.1}
  #allocation0 [shape = 'u32[]', space=smem, size = 0x4, offset = 0x4, fixed_abs, tag = 'smem constant byte address 0x4 - core index']
  #allocation1 [shape = 'u32[144,128]{1,0:T(1,128)}', space=vmem, size = 0x12000, scoped, tag = 'internal scratch']
  %s0 = inlined_call_operand.vmem [shape: bf16[56,768], index: 0, kind: input, shape index: {}]
  %s1 = inlined_call_operand.vmem [shape: f32[56,8], index: 1, kind: input, shape index: {}]
  %s2 = inlined_call_operand.vmem [shape: bf16[768,8], index: 2, kind: input, shape index: {}]
  %s3 = inlined_call_operand.vmem [shape: f32[1,8], index: 3, kind: input, shape index: {}]
  %s4 = inlined_call_operand.vmem [shape: bf16[768,8], index: 4, kind: input, shape index: {}]
  %s5 = inlined_call_operand.vmem [shape: f32[1,8], index: 5, kind: input, shape index: {}]
  %s6 = inlined_call_operand.vmem [shape: bf16[8,768], index: 6, kind: input, shape index: {}]
  %s7 = inlined_call_operand.vmem [shape: f32[1,768], index: 7, kind: input, shape index: {}]
  %s8 = inlined_call_operand.vmem [shape: f32[56,768], index: 8, kind: output, shape index: {0}]
  %s9 = inlined_call_operand.vmem [shape: f32[1,8,128], index: 9, kind: output, shape index: {1}]
  %10 = xla_tuple %s8, %s9
  %s11 = sld [smem:[#allocation0]]
  $region50: #{kl_model_forward.1} parent=0
    _
  %s13 = ssub.s32 1, %s11
  %s14 = scalar_select 0, %s13, %s11
  // Predicated region
  $region2: #{kl_model_forward.1} parent=0 // pred_check
    _
  $region3: #{kl_model_forward.1} parent=0 // pred_check_branch
    %16 = sbr.rel (0) target = $region5
  $region4: #{kl_model_forward.1} parent=0 // pred_region
    _
  $region5: #{kl_model_forward.1} parent=0 // pred_fallthru
    _
  // Predicated region
  $region6: #{kl_model_forward.1} parent=0 // pred_check
    _
  $region7: #{kl_model_forward.1} parent=0 // pred_check_branch
    %18 = sbr.rel (0) target = $region9
  $region8: #{kl_model_forward.1} parent=0 // pred_region
    _
  $region9: #{kl_model_forward.1} parent=0 // pred_fallthru
    _
  // Predicated region
  $region10: #{kl_model_forward.1} parent=0 // pred_check
    _
  $region11: #{kl_model_forward.1} parent=0 // pred_check_branch
    %20 = sbr.rel (0) target = $region13
  $region12: #{kl_model_forward.1} parent=0 // pred_region
    _
  $region13: #{kl_model_forward.1} parent=0 // pred_fallthru
    _
  // Predicated region
  $region14: #{kl_model_forward.1} parent=0 // pred_check
    _
  $region15: #{kl_model_forward.1} parent=0 // pred_check_branch
    %22 = sbr.rel (0) target = $region17
  $region16: #{kl_model_forward.1} parent=0 // pred_region
    _
  $region17: #{kl_model_forward.1} parent=0 // pred_fallthru
    _
  // Predicated region
  $region18: #{kl_model_forward.1} parent=0 // pred_check
    _
  $region19: #{kl_model_forward.1} parent=0 // pred_check_branch
    %24 = sbr.rel (0) target = $region21
  $region20: #{kl_model_forward.1} parent=0 // pred_region
    _
  $region21: #{kl_model_forward.1} parent=0 // pred_fallthru
    _
  // Predicated region
  $region22: #{kl_model_forward.1} parent=0 // pred_check
    _
  $region23: #{kl_model_forward.1} parent=0 // pred_check_branch
    %26 = sbr.rel (0) target = $region25
  $region24: #{kl_model_forward.1} parent=0 // pred_region
    _
  $region25: #{kl_model_forward.1} parent=0 // pred_fallthru
    _
  // Predicated region
  $region26: #{kl_model_forward.1} parent=0 // pred_check
    _
  $region27: #{kl_model_forward.1} parent=0 // pred_check_branch
    %28 = sbr.rel (0) target = $region29
  $region28: #{kl_model_forward.1} parent=0 // pred_region
    _
  $region29: #{kl_model_forward.1} parent=0 // pred_fallthru
    _
  // Predicated region
  $region30: #{kl_model_forward.1} parent=0 // pred_check
    _
  $region31: #{kl_model_forward.1} parent=0 // pred_check_branch
    %30 = sbr.rel (0) target = $region33
  $region32: #{kl_model_forward.1} parent=0 // pred_region
    _
  $region33: #{kl_model_forward.1} parent=0 // pred_fallthru
    _
  %v32 = vld [vmem:[%s0] sm:$0xff]
  %v33 = vld [vmem:[%s0 + $0x8] sm:$0xff]
  %v34 = vld [vmem:[%s0 + $0x10] sm:$0xff]
  %v35 = vld [vmem:[%s0 + $0x18] sm:$0xff]
  %v36 = vld [vmem:[%s0 + $0x20] sm:$0xff]
  %v37 = vld [vmem:[%s0 + $0x28] sm:$0xff]
  %v38 = vld [vmem:[%s0 + $0x30] sm:$0xff]
  %v39 = vld [vmem:[%s0 + $0x38] sm:$0xff]
  %v40 = vld [vmem:[%s0 + $0x40] sm:$0xff]
  %v41 = vld [vmem:[%s0 + $0x48] sm:$0xff]
  %v42 = vld [vmem:[%s0 + $0x50] sm:$0xff]
  %v43 = vld [vmem:[%s0 + $0x58] sm:$0xff]
  %v44 = vld [vmem:[%s0 + $0x60] sm:$0xff]
  %v45 = vld [vmem:[%s0 + $0x68] sm:$0xff]
  %v46 = vld [vmem:[%s0 + $0x70] sm:$0xff]
  %v47 = vld [vmem:[%s0 + $0x78] sm:$0xff]
  %v48 = vld [vmem:[%s0 + $0x80] sm:$0xff]
  %v49 = vld [vmem:[%s0 + $0x88] sm:$0xff]
  %v50 = vld [vmem:[%s0 + $0x90] sm:$0xff]
  %v51 = vld [vmem:[%s0 + $0x98] sm:$0xff]
  %v52 = vld [vmem:[%s0 + $0xa0] sm:$0xff]
  %v53 = vld [vmem:[%s2] sm:$0xf]
  %v54 = vld [vmem:[%s2 + $0x4] sm:$0xf]
  %v55 = vld [vmem:[%s2 + $0x8] sm:$0xf]
  %v56 = vld [vmem:[%s2 + $0xc] sm:$0xf]
  %v57 = vld [vmem:[%s2 + $0x10] sm:$0xf]
  %v58 = vld [vmem:[%s2 + $0x14] sm:$0xf]
  %v59 = vld [vmem:[%s2 + $0x18] sm:$0xf]
  %v60 = vld [vmem:[%s2 + $0x1c] sm:$0xf]
  %v61 = vld [vmem:[%s2 + $0x20] sm:$0xf]
  %v62 = vld [vmem:[%s2 + $0x24] sm:$0xf]
  %v63 = vld [vmem:[%s2 + $0x28] sm:$0xf]
  %v64 = vld [vmem:[%s2 + $0x2c] sm:$0xf]
  %v65 = vld [vmem:[%s2 + $0x30] sm:$0xf]
  %v66 = vld [vmem:[%s2 + $0x34] sm:$0xf]
  %v67 = vld [vmem:[%s2 + $0x38] sm:$0xf]
  %v68 = vld [vmem:[%s2 + $0x3c] sm:$0xf]
  %v69 = vld [vmem:[%s2 + $0x40] sm:$0xf]
  %v70 = vld [vmem:[%s2 + $0x44] sm:$0xf]
  %v71 = vld [vmem:[%s2 + $0x48] sm:$0xf]
  %v72 = vld [vmem:[%s2 + $0x4c] sm:$0xf]
  %v73 = vld [vmem:[%s2 + $0x50] sm:$0xf]
  %v74 = vld [vmem:[%s2 + $0x54] sm:$0xf]
  %v75 = vld [vmem:[%s2 + $0x58] sm:$0xf]
  %v76 = vld [vmem:[%s2 + $0x5c] sm:$0xf]
  %v77 = vld [vmem:[%s2 + $0x60] sm:$0xf]
  %v78 = vld [vmem:[%s2 + $0x64] sm:$0xf]
  %v79 = vld [vmem:[%s2 + $0x68] sm:$0xf]
  %v80 = vld [vmem:[%s2 + $0x6c] sm:$0xf]
  %v81 = vld [vmem:[%s2 + $0x70] sm:$0xf]
  %v82 = vld [vmem:[%s2 + $0x74] sm:$0xf]
  %v83 = vld [vmem:[%s2 + $0x78] sm:$0xf]
  %v84 = vld [vmem:[%s2 + $0x7c] sm:$0xf]
  %v85 = vld [vmem:[%s2 + $0x80] sm:$0xf]
  %v86 = vld [vmem:[%s2 + $0x84] sm:$0xf]
  %v87 = vld [vmem:[%s2 + $0x88] sm:$0xf]
  %v88 = vld [vmem:[%s2 + $0x8c] sm:$0xf]
  %v89 = vld [vmem:[%s2 + $0x90] sm:$0xf]
  %v90 = vld [vmem:[%s2 + $0x94] sm:$0xf]
  %v91 = vld [vmem:[%s2 + $0x98] sm:$0xf]
  %v92 = vld [vmem:[%s2 + $0x9c] sm:$0xf]
  %v93 = vld [vmem:[%s2 + $0xa0] sm:$0xf]
  %v94 = vld [vmem:[%s2 + $0xa4] sm:$0xf]
  %v95 = vld [vmem:[%s2 + $0xa8] sm:$0xf]
  %v96 = vld [vmem:[%s2 + $0xac] sm:$0xf]
  %v97 = vld [vmem:[%s2 + $0xb0] sm:$0xf]
  %v98 = vld [vmem:[%s2 + $0xb4] sm:$0xf]
  %v99 = vld [vmem:[%s2 + $0xb8] sm:$0xf]
  %v100 = vld [vmem:[%s2 + $0xbc] sm:$0xf]
  %v101 = vld [vmem:[%s2 + $0xc0] sm:$0xf]
  %v102 = vld [vmem:[%s2 + $0xc4] sm:$0xf]
  %v103 = vld [vmem:[%s2 + $0xc8] sm:$0xf]
  %v104 = vld [vmem:[%s2 + $0xcc] sm:$0xf]
  %v105 = vld [vmem:[%s2 + $0xd0] sm:$0xf]
  %v106 = vld [vmem:[%s2 + $0xd4] sm:$0xf]
  %v107 = vld [vmem:[%s2 + $0xd8] sm:$0xf]
  %v108 = vld [vmem:[%s2 + $0xdc] sm:$0xf]
  %v109 = vld [vmem:[%s2 + $0xe0] sm:$0xf]
  %v110 = vld [vmem:[%s2 + $0xe4] sm:$0xf]
  %v111 = vld [vmem:[%s2 + $0xe8] sm:$0xf]
  %v112 = vld [vmem:[%s2 + $0xec] sm:$0xf]
  %v113 = vld [vmem:[%s2 + $0xf0] sm:$0xf]
  %v114 = vld [vmem:[%s2 + $0xf4] sm:$0xf]
  %v115 = vld [vmem:[%s2 + $0xf8] sm:$0xf]
  %v116 = vld [vmem:[%s2 + $0xfc] sm:$0xf]
  %v117 = vld [vmem:[%s2 + $0x100] sm:$0xf]
  %v118 = vld [vmem:[%s2 + $0x104] sm:$0xf]
  %v119 = vld [vmem:[%s2 + $0x108] sm:$0xf]
  %v120 = vld [vmem:[%s2 + $0x10c] sm:$0xf]
  %v121 = vld [vmem:[%s2 + $0x110] sm:$0xf]
  %v122 = vld [vmem:[%s2 + $0x114] sm:$0xf]
  %v123 = vld [vmem:[%s2 + $0x118] sm:$0xf]
  %v124 = vld [vmem:[%s2 + $0x11c] sm:$0xf]
  %v125 = vld [vmem:[%s2 + $0x120] sm:$0xf]
  %v126 = vld [vmem:[%s2 + $0x124] sm:$0xf]
  %v127 = vld [vmem:[%s2 + $0x128] sm:$0xf]
  %v128 = vld [vmem:[%s2 + $0x12c] sm:$0xf]
  %v129 = vld [vmem:[%s2 + $0x130] sm:$0xf]
  %v130 = vld [vmem:[%s2 + $0x134] sm:$0xf]
  %v131 = vld [vmem:[%s2 + $0x138] sm:$0xf]
  %v132 = vld [vmem:[%s2 + $0x13c] sm:$0xf]
  %v133 = vld [vmem:[%s2 + $0x140] sm:$0xf]
  %v134 = vld [vmem:[%s2 + $0x144] sm:$0xf]
  %v135 = vld [vmem:[%s2 + $0x148] sm:$0xf]
  %v136 = vld [vmem:[%s2 + $0x14c] sm:$0xf]
  %v137 = vld [vmem:[%s2 + $0x150] sm:$0xf]
  %v138 = vld [vmem:[%s2 + $0x154] sm:$0xf]
  %v139 = vld [vmem:[%s2 + $0x158] sm:$0xf]
  %v140 = vld [vmem:[%s2 + $0x15c] sm:$0xf]
  %v141 = vld [vmem:[%s2 + $0x160] sm:$0xf]
  %v142 = vld [vmem:[%s2 + $0x164] sm:$0xf]
  %v143 = vld [vmem:[%s2 + $0x168] sm:$0xf]
  %v144 = vld [vmem:[%s2 + $0x16c] sm:$0xf]
  %v145 = vld [vmem:[%s2 + $0x170] sm:$0xf]
  %v146 = vld [vmem:[%s2 + $0x174] sm:$0xf]
  %v147 = vld [vmem:[%s2 + $0x178] sm:$0xf]
  %v148 = vld [vmem:[%s2 + $0x17c] sm:$0xf]
  %v149 = vld [vmem:[%s3] sm:$0x1]
  %v151 = vlaneseq
  %v152 = vshrl.u32 %v151, 7
  %v153 = vsub.s32 0, %v152
  %v154 = vrot.slane %v149, %v153
  %v177 = vunpack.c.l.b16 %v32
  %v178 = vunpack.c.h.b16 %v32
  %v179 = vunpack.c.l.b16 %v33
  %v180 = vunpack.c.h.b16 %v33
  %v181 = vunpack.c.l.b16 %v34
  %v182 = vunpack.c.h.b16 %v34
  %v183 = vunpack.c.l.b16 %v35
  %v184 = vunpack.c.h.b16 %v35
  %v185 = vunpack.c.l.b16 %v36
  %v186 = vunpack.c.h.b16 %v36
  %v187 = vunpack.c.l.b16 %v37
  %v188 = vunpack.c.h.b16 %v37
  %v189 = vunpack.c.l.b16 %v38
  %v190 = vunpack.c.h.b16 %v38
  %v191 = vunpack.c.l.b16 %v39
  %v192 = vunpack.c.h.b16 %v39
  %v193 = vunpack.c.l.b16 %v40
  %v194 = vunpack.c.h.b16 %v40
  %v195 = vunpack.c.l.b16 %v41
  %v196 = vunpack.c.h.b16 %v41
  %v197 = vunpack.c.l.b16 %v42
  %v198 = vunpack.c.h.b16 %v42
  %v199 = vunpack.c.l.b16 %v43
  %v200 = vunpack.c.h.b16 %v43
  %v201 = vunpack.c.l.b16 %v44
  %v202 = vunpack.c.h.b16 %v44
  %v203 = vunpack.c.l.b16 %v45
  %v204 = vunpack.c.h.b16 %v45
  %v205 = vunpack.c.l.b16 %v46
  %v206 = vunpack.c.h.b16 %v46
  %v207 = vunpack.c.l.b16 %v47
  %v208 = vunpack.c.h.b16 %v47
  %v209 = vunpack.c.l.b16 %v48
  %v210 = vunpack.c.h.b16 %v48
  %v211 = vunpack.c.l.b16 %v49
  %v212 = vunpack.c.h.b16 %v49
  %v213 = vunpack.c.l.b16 %v50
  %v214 = vunpack.c.h.b16 %v50
  %v215 = vunpack.c.l.b16 %v51
  %v216 = vunpack.c.h.b16 %v51
  %v217 = vunpack.c.l.b16 %v52
  %v218 = vunpack.c.h.b16 %v52
  %v219 = vpack.c.b16 %v183, %v177
  %v220 = vpack.c.b16 %v184, %v178
  %v221 = vpack.c.b16 %v185, %v179
  %v222 = vpack.c.b16 %v186, %v180
  %v223 = vpack.c.b16 %v187, %v181
  %v224 = vpack.c.b16 %v188, %v182
  %v225 = vpack.c.b16 %v195, %v189
  %v226 = vpack.c.b16 %v196, %v190
  %v227 = vpack.c.b16 %v197, %v191
  %v228 = vpack.c.b16 %v198, %v192
  %v229 = vpack.c.b16 %v199, %v193
  %v230 = vpack.c.b16 %v200, %v194
  %v231 = vpack.c.b16 %v207, %v201
  %v232 = vpack.c.b16 %v208, %v202
  %v233 = vpack.c.b16 %v209, %v203
  %v234 = vpack.c.b16 %v210, %v204
  %v235 = vpack.c.b16 %v211, %v205
  %v236 = vpack.c.b16 %v212, %v206
  %v237 = vpack.c.b16 %v213, %v213
  %v238 = vpack.c.b16 %v214, %v214
  %v239 = vpack.c.b16 %v215, %v215
  %v240 = vpack.c.b16 %v216, %v216
  %v241 = vpack.c.b16 %v217, %v217
  %v242 = vpack.c.b16 %v218, %v218
  %v363 = vunpack.c.l.b16 %v53
  %v364 = vunpack.c.l.b16 %v54
  %v365 = vunpack.c.l.b16 %v55
  %v366 = vunpack.c.l.b16 %v56
  %v367 = vunpack.c.l.b16 %v57
  %v368 = vunpack.c.l.b16 %v58
  %v369 = vunpack.c.l.b16 %v59
  %v370 = vunpack.c.l.b16 %v60
  %v371 = vunpack.c.l.b16 %v61
  %v372 = vunpack.c.l.b16 %v62
  %v373 = vunpack.c.l.b16 %v63
  %v374 = vunpack.c.l.b16 %v64
  %v375 = vunpack.c.l.b16 %v65
  %v376 = vunpack.c.l.b16 %v66
  %v377 = vunpack.c.l.b16 %v67
  %v378 = vunpack.c.l.b16 %v68
  %v379 = vunpack.c.l.b16 %v69
  %v380 = vunpack.c.l.b16 %v70
  %v381 = vunpack.c.l.b16 %v71
  %v382 = vunpack.c.l.b16 %v72
  %v383 = vunpack.c.l.b16 %v73
  %v384 = vunpack.c.l.b16 %v74
  %v385 = vunpack.c.l.b16 %v75
  %v386 = vunpack.c.l.b16 %v76
  %v387 = vunpack.c.l.b16 %v77
  %v388 = vunpack.c.l.b16 %v78
  %v389 = vunpack.c.l.b16 %v79
  %v390 = vunpack.c.l.b16 %v80
  %v391 = vunpack.c.l.b16 %v81
  %v392 = vunpack.c.l.b16 %v82
  %v393 = vunpack.c.l.b16 %v83
  %v394 = vunpack.c.l.b16 %v84
  %v395 = vunpack.c.l.b16 %v85
  %v396 = vunpack.c.l.b16 %v86
  %v397 = vunpack.c.l.b16 %v87
  %v398 = vunpack.c.l.b16 %v88
  %v399 = vunpack.c.l.b16 %v89
  %v400 = vunpack.c.l.b16 %v90
  %v401 = vunpack.c.l.b16 %v91
  %v402 = vunpack.c.l.b16 %v92
  %v403 = vunpack.c.l.b16 %v93
  %v404 = vunpack.c.l.b16 %v94
  %v405 = vunpack.c.l.b16 %v95
  %v406 = vunpack.c.l.b16 %v96
  %v407 = vunpack.c.l.b16 %v97
  %v408 = vunpack.c.l.b16 %v98
  %v409 = vunpack.c.l.b16 %v99
  %v410 = vunpack.c.l.b16 %v100
  %v411 = vunpack.c.l.b16 %v101
  %v412 = vunpack.c.l.b16 %v102
  %v413 = vunpack.c.l.b16 %v103
  %v414 = vunpack.c.l.b16 %v104
  %v415 = vunpack.c.l.b16 %v105
  %v416 = vunpack.c.l.b16 %v106
  %v417 = vunpack.c.l.b16 %v107
  %v418 = vunpack.c.l.b16 %v108
  %v419 = vunpack.c.l.b16 %v109
  %v420 = vunpack.c.l.b16 %v110
  %v421 = vunpack.c.l.b16 %v111
  %v422 = vunpack.c.l.b16 %v112
  %v423 = vunpack.c.l.b16 %v113
  %v424 = vunpack.c.l.b16 %v114
  %v425 = vunpack.c.l.b16 %v115
  %v426 = vunpack.c.l.b16 %v116
  %v427 = vunpack.c.l.b16 %v117
  %v428 = vunpack.c.l.b16 %v118
  %v429 = vunpack.c.l.b16 %v119
  %v430 = vunpack.c.l.b16 %v120
  %v431 = vunpack.c.l.b16 %v121
  %v432 = vunpack.c.l.b16 %v122
  %v433 = vunpack.c.l.b16 %v123
  %v434 = vunpack.c.l.b16 %v124
  %v435 = vunpack.c.l.b16 %v125
  %v436 = vunpack.c.l.b16 %v126
  %v437 = vunpack.c.l.b16 %v127
  %v438 = vunpack.c.l.b16 %v128
  %v439 = vunpack.c.l.b16 %v129
  %v440 = vunpack.c.l.b16 %v130
  %v441 = vunpack.c.l.b16 %v131
  %v442 = vunpack.c.l.b16 %v132
  %v443 = vunpack.c.l.b16 %v133
  %v444 = vunpack.c.l.b16 %v134
  %v445 = vunpack.c.l.b16 %v135
  %v446 = vunpack.c.l.b16 %v136
  %v447 = vunpack.c.l.b16 %v137
  %v448 = vunpack.c.l.b16 %v138
  %v449 = vunpack.c.l.b16 %v139
  %v450 = vunpack.c.l.b16 %v140
  %v451 = vunpack.c.l.b16 %v141
  %v452 = vunpack.c.l.b16 %v142
  %v453 = vunpack.c.l.b16 %v143
  %v454 = vunpack.c.l.b16 %v144
  %v455 = vunpack.c.l.b16 %v145
  %v456 = vunpack.c.l.b16 %v146
  %v457 = vunpack.c.l.b16 %v147
  %v458 = vunpack.c.l.b16 %v148
  %v459 = vpack.c.b16 %v364, %v363
  %v460 = vpack.c.b16 %v366, %v365
  %v461 = vpack.c.b16 %v368, %v367
  %v462 = vpack.c.b16 %v370, %v369
  %v463 = vpack.c.b16 %v372, %v371
  %v464 = vpack.c.b16 %v374, %v373
  %v465 = vpack.c.b16 %v376, %v375
  %v466 = vpack.c.b16 %v378, %v377
  %v467 = vpack.c.b16 %v380, %v379
  %v468 = vpack.c.b16 %v382, %v381
  %v469 = vpack.c.b16 %v384, %v383
  %v470 = vpack.c.b16 %v386, %v385
  %v471 = vpack.c.b16 %v388, %v387
  %v472 = vpack.c.b16 %v390, %v389
  %v473 = vpack.c.b16 %v392, %v391
  %v474 = vpack.c.b16 %v394, %v393
  %v475 = vpack.c.b16 %v396, %v395
  %v476 = vpack.c.b16 %v398, %v397
  %v477 = vpack.c.b16 %v400, %v399
  %v478 = vpack.c.b16 %v402, %v401
  %v479 = vpack.c.b16 %v404, %v403
  %v480 = vpack.c.b16 %v406, %v405
  %v481 = vpack.c.b16 %v408, %v407
  %v482 = vpack.c.b16 %v410, %v409
  %v483 = vpack.c.b16 %v412, %v411
  %v484 = vpack.c.b16 %v414, %v413
  %v485 = vpack.c.b16 %v416, %v415
  %v486 = vpack.c.b16 %v418, %v417
  %v487 = vpack.c.b16 %v420, %v419
  %v488 = vpack.c.b16 %v422, %v421
  %v489 = vpack.c.b16 %v424, %v423
  %v490 = vpack.c.b16 %v426, %v425
  %v491 = vpack.c.b16 %v428, %v427
  %v492 = vpack.c.b16 %v430, %v429
  %v493 = vpack.c.b16 %v432, %v431
  %v494 = vpack.c.b16 %v434, %v433
  %v495 = vpack.c.b16 %v436, %v435
  %v496 = vpack.c.b16 %v438, %v437
  %v497 = vpack.c.b16 %v440, %v439
  %v498 = vpack.c.b16 %v442, %v441
  %v499 = vpack.c.b16 %v444, %v443
  %v500 = vpack.c.b16 %v446, %v445
  %v501 = vpack.c.b16 %v448, %v447
  %v502 = vpack.c.b16 %v450, %v449
  %v503 = vpack.c.b16 %v452, %v451
  %v504 = vpack.c.b16 %v454, %v453
  %v505 = vpack.c.b16 %v456, %v455
  %v506 = vpack.c.b16 %v458, %v457
  %555 = vmatprep.subr.bf16.mxu0 0
  %556 = vmatpush1.bf16.msra.mxu0 %v459
  %557 = vmatprep.subr.bf16.mxu0 0
  %558 = vmatpush1.bf16.msra.mxu0 %v460
  %559 = vmatprep.subr.bf16.mxu0 0
  %560 = vmatpush1.bf16.msra.mxu0 %v461
  %561 = vmatprep.subr.bf16.mxu0 0
  %562 = vmatpush1.bf16.msra.mxu0 %v462
  %563 = vmatprep.subr.bf16.mxu0 0
  %564 = vmatpush1.bf16.msra.mxu0 %v463
  %565 = vmatprep.subr.bf16.mxu0 0
  %566 = vmatpush1.bf16.msra.mxu0 %v464
  %567 = vmatprep.subr.bf16.mxu0 0
  %568 = vmatpush1.bf16.msra.mxu0 %v465
  %569 = vmatprep.subr.bf16.mxu0 0
  %570 = vmatpush1.bf16.msra.mxu0 %v466
  %571 = vmatprep.subr.bf16.mxu0 0
  %572 = vmatpush1.bf16.msra.mxu0 %v467
  %573 = vmatprep.subr.bf16.mxu0 0
  %574 = vmatpush1.bf16.msra.mxu0 %v468
  %575 = vmatprep.subr.bf16.mxu0 0
  %576 = vmatpush1.bf16.msra.mxu0 %v469
  %577 = vmatprep.subr.bf16.mxu0 0
  %578 = vmatpush1.bf16.msra.mxu0 %v470
  %579 = vmatprep.subr.bf16.mxu0 0
  %580 = vmatpush1.bf16.msra.mxu0 %v471
  %581 = vmatprep.subr.bf16.mxu0 0
  %582 = vmatpush1.bf16.msra.mxu0 %v472
  %583 = vmatprep.subr.bf16.mxu0 0
  %584 = vmatpush1.bf16.msra.mxu0 %v473
  %585 = vmatprep.subr.bf16.mxu0 0
  %586 = vmatpush1.bf16.msra.mxu0 %v474
  %587 = vmatprep.mubr.bf16.mxu0 %v220
  %588 = vmatmul.mubr.bf16.gmra.mrb[0].mxu0 %v219
  %v589 = vpop.f32.mrb[0].mxu0
  %v590 = vadd.f32 %v154, %v589
  %v591 = vpop.f32.mrb[0].mxu0
  %v592 = vpop.f32.mrb[0].mxu0
  %v593 = vadd.f32 %v154, %v592
  %v594 = vpop.f32.mrb[0].mxu0
  %595 = vmatprep.mubr.bf16.mxu0 %v226
  %596 = vmatmul.mubr.bf16.gmra.mrb[0].mxu0 %v225
  %v597 = vpop.f32.mrb[0].mxu0
  %v598 = vadd.f32 %v154, %v597
  %v599 = vpop.f32.mrb[0].mxu0
  %v600 = vpop.f32.mrb[0].mxu0
  %v601 = vadd.f32 %v154, %v600
  %v602 = vpop.f32.mrb[0].mxu0
  %603 = vmatprep.mubr.bf16.mxu0 %v232
  %604 = vmatmul.mubr.bf16.gmra.mrb[0].mxu0 %v231
  %v605 = vpop.f32.mrb[0].mxu0
  %v606 = vadd.f32 %v154, %v605
  %v607 = vpop.f32.mrb[0].mxu0
  %v608 = vpop.f32.mrb[0].mxu0
  %v609 = vadd.f32 %v154, %v608
  %v610 = vpop.f32.mrb[0].mxu0
  %611 = vmatprep.mubr.bf16.mxu0 %v238
  %612 = vmatmul.mubr.bf16.gmra.mrb[0].mxu0 %v237
  %v613 = vpop.f32.mrb[0].mxu0
  %v614 = vadd.f32 %v154, %v613
  %v615 = vpop.f32.mrb[0].mxu0
  %v616 = vpop.f32.mrb[0].mxu0
  %v617 = vpop.f32.mrb[0].mxu0
  %618 = vdwg.mxu0
  %619 = vmatprep.subr.bf16.mxu0 0
  %620 = vmatpush1.bf16.msra.mxu0 %v475
  %621 = vmatprep.subr.bf16.mxu0 0
  %622 = vmatpush1.bf16.msra.mxu0 %v476
  %623 = vmatprep.subr.bf16.mxu0 0
  %624 = vmatpush1.bf16.msra.mxu0 %v477
  %625 = vmatprep.subr.bf16.mxu0 0
  %626 = vmatpush1.bf16.msra.mxu0 %v478
  %627 = vmatprep.subr.bf16.mxu0 0
  %628 = vmatpush1.bf16.msra.mxu0 %v479
  %629 = vmatprep.subr.bf16.mxu0 0
  %630 = vmatpush1.bf16.msra.mxu0 %v480
  %631 = vmatprep.subr.bf16.mxu0 0
  %632 = vmatpush1.bf16.msra.mxu0 %v481
  %633 = vmatprep.subr.bf16.mxu0 0
  %634 = vmatpush1.bf16.msra.mxu0 %v482
  %635 = vmatprep.subr.bf16.mxu0 0
  %636 = vmatpush1.bf16.msra.mxu0 %v483
  %637 = vmatprep.subr.bf16.mxu0 0
  %638 = vmatpush1.bf16.msra.mxu0 %v484
  %639 = vmatprep.subr.bf16.mxu0 0
  %640 = vmatpush1.bf16.msra.mxu0 %v485
  %641 = vmatprep.subr.bf16.mxu0 0
  %642 = vmatpush1.bf16.msra.mxu0 %v486
  %643 = vmatprep.subr.bf16.mxu0 0
  %644 = vmatpush1.bf16.msra.mxu0 %v487
  %645 = vmatprep.subr.bf16.mxu0 0
  %646 = vmatpush1.bf16.msra.mxu0 %v488
  %647 = vmatprep.subr.bf16.mxu0 0
  %648 = vmatpush1.bf16.msra.mxu0 %v489
  %649 = vmatprep.subr.bf16.mxu0 0
  %650 = vmatpush1.bf16.msra.mxu0 %v490
  %651 = vmatprep.mubr.bf16.mxu0 %v222
  %652 = vmatmul.mubr.bf16.gmra.mrb[0].mxu0 %v221
  %v653 = vpop.f32.mrb[0].mxu0
  %v654 = vadd.f32 %v590, %v653
  %v655 = vpop.f32.mrb[0].mxu0
  %v656 = vpop.f32.mrb[0].mxu0
  %v657 = vadd.f32 %v593, %v656
  %v658 = vpop.f32.mrb[0].mxu0
  %659 = vmatprep.mubr.bf16.mxu0 %v228
  %660 = vmatmul.mubr.bf16.gmra.mrb[0].mxu0 %v227
  %v661 = vpop.f32.mrb[0].mxu0
  %v662 = vadd.f32 %v598, %v661
  %v663 = vpop.f32.mrb[0].mxu0
  %v664 = vpop.f32.mrb[0].mxu0
  %v665 = vadd.f32 %v601, %v664
  %v666 = vpop.f32.mrb[0].mxu0
  %667 = vmatprep.mubr.bf16.mxu0 %v234
  %668 = vmatmul.mubr.bf16.gmra.mrb[0].mxu0 %v233
  %v669 = vpop.f32.mrb[0].mxu0
  %v670 = vadd.f32 %v606, %v669
  %v671 = vpop.f32.mrb[0].mxu0
  %v672 = vpop.f32.mrb[0].mxu0
  %v673 = vadd.f32 %v609, %v672
  %v674 = vpop.f32.mrb[0].mxu0
  %675 = vmatprep.mubr.bf16.mxu0 %v240
  %676 = vmatmul.mubr.bf16.gmra.mrb[0].mxu0 %v239
  %v677 = vpop.f32.mrb[0].mxu0
  %v678 = vadd.f32 %v614, %v677
  %v679 = vpop.f32.mrb[0].mxu0
  %v680 = vpop.f32.mrb[0].mxu0
  %v681 = vpop.f32.mrb[0].mxu0
  %682 = vdwg.mxu0
  %683 = vmatprep.subr.bf16.mxu0 0
  %684 = vmatpush1.bf16.msra.mxu0 %v491
  %685 = vmatprep.subr.bf16.mxu0 0
  %686 = vmatpush1.bf16.msra.mxu0 %v492
  %687 = vmatprep.subr.bf16.mxu0 0
  %688 = vmatpush1.bf16.msra.mxu0 %v493
  %689 = vmatprep.subr.bf16.mxu0 0
  %690 = vmatpush1.bf16.msra.mxu0 %v494
  %691 = vmatprep.subr.bf16.mxu0 0
  %692 = vmatpush1.bf16.msra.mxu0 %v495
  %693 = vmatprep.subr.bf16.mxu0 0
  %694 = vmatpush1.bf16.msra.mxu0 %v496
  %695 = vmatprep.subr.bf16.mxu0 0
  %696 = vmatpush1.bf16.msra.mxu0 %v497
  %697 = vmatprep.subr.bf16.mxu0 0
  %698 = vmatpush1.bf16.msra.mxu0 %v498
  %699 = vmatprep.subr.bf16.mxu0 0
  %700 = vmatpush1.bf16.msra.mxu0 %v499
  %701 = vmatprep.subr.bf16.mxu0 0
  %702 = vmatpush1.bf16.msra.mxu0 %v500
  %703 = vmatprep.subr.bf16.mxu0 0
  %704 = vmatpush1.bf16.msra.mxu0 %v501
  %705 = vmatprep.subr.bf16.mxu0 0
  %706 = vmatpush1.bf16.msra.mxu0 %v502
  %707 = vmatprep.subr.bf16.mxu0 0
  %708 = vmatpush1.bf16.msra.mxu0 %v503
  %709 = vmatprep.subr.bf16.mxu0 0
  %710 = vmatpush1.bf16.msra.mxu0 %v504
  %711 = vmatprep.subr.bf16.mxu0 0
  %712 = vmatpush1.bf16.msra.mxu0 %v505
  %713 = vmatprep.subr.bf16.mxu0 0
  %714 = vmatpush1.bf16.msra.mxu0 %v506
  %715 = vmatprep.mubr.bf16.mxu0 %v224
  %716 = vmatmul.mubr.bf16.gmra.mrb[0].mxu0 %v223
  %v717 = vpop.f32.mrb[0].mxu0
  %v718 = vadd.f32 %v654, %v717
  %v719 = vpop.f32.mrb[0].mxu0
  %v720 = vpop.f32.mrb[0].mxu0
  %v721 = vadd.f32 %v657, %v720
  %v722 = vpop.f32.mrb[0].mxu0
  %723 = vmatprep.mubr.bf16.mxu0 %v230
  %724 = vmatmul.mubr.bf16.gmra.mrb[0].mxu0 %v229
  %v725 = vpop.f32.mrb[0].mxu0
  %v726 = vadd.f32 %v662, %v725
  %v727 = vpop.f32.mrb[0].mxu0
  %v728 = vpop.f32.mrb[0].mxu0
  %v729 = vadd.f32 %v665, %v728
  %v730 = vpop.f32.mrb[0].mxu0
  %731 = vmatprep.mubr.bf16.mxu0 %v236
  %732 = vmatmul.mubr.bf16.gmra.mrb[0].mxu0 %v235
  %v733 = vpop.f32.mrb[0].mxu0
  %v734 = vadd.f32 %v670, %v733
  %v735 = vpop.f32.mrb[0].mxu0
  %v736 = vpop.f32.mrb[0].mxu0
  %v737 = vadd.f32 %v673, %v736
  %v738 = vpop.f32.mrb[0].mxu0
  %739 = vmatprep.mubr.bf16.mxu0 %v242
  %740 = vmatmul.mubr.bf16.gmra.mrb[0].mxu0 %v241
  %v741 = vpop.f32.mrb[0].mxu0
  %v742 = vadd.f32 %v678, %v741
  %v743 = vpop.f32.mrb[0].mxu0
  %v744 = vpop.f32.mrb[0].mxu0
  %v745 = vpop.f32.mrb[0].mxu0
  %746 = vdwg.mxu0
  %v747 = vld [vmem:[%s4] sm:$0xf]
  %v748 = vld [vmem:[%s4 + $0x4] sm:$0xf]
  %v749 = vld [vmem:[%s4 + $0x8] sm:$0xf]
  %v750 = vld [vmem:[%s4 + $0xc] sm:$0xf]
  %v751 = vld [vmem:[%s4 + $0x10] sm:$0xf]
  %v752 = vld [vmem:[%s4 + $0x14] sm:$0xf]
  %v753 = vld [vmem:[%s4 + $0x18] sm:$0xf]
  %v754 = vld [vmem:[%s4 + $0x1c] sm:$0xf]
  %v755 = vld [vmem:[%s4 + $0x20] sm:$0xf]
  %v756 = vld [vmem:[%s4 + $0x24] sm:$0xf]
  %v757 = vld [vmem:[%s4 + $0x28] sm:$0xf]
  %v758 = vld [vmem:[%s4 + $0x2c] sm:$0xf]
  %v759 = vld [vmem:[%s4 + $0x30] sm:$0xf]
  %v760 = vld [vmem:[%s4 + $0x34] sm:$0xf]
  %v761 = vld [vmem:[%s4 + $0x38] sm:$0xf]
  %v762 = vld [vmem:[%s4 + $0x3c] sm:$0xf]
  %v763 = vld [vmem:[%s4 + $0x40] sm:$0xf]
  %v764 = vld [vmem:[%s4 + $0x44] sm:$0xf]
  %v765 = vld [vmem:[%s4 + $0x48] sm:$0xf]
  %v766 = vld [vmem:[%s4 + $0x4c] sm:$0xf]
  %v767 = vld [vmem:[%s4 + $0x50] sm:$0xf]
  %v768 = vld [vmem:[%s4 + $0x54] sm:$0xf]
  %v769 = vld [vmem:[%s4 + $0x58] sm:$0xf]
  %v770 = vld [vmem:[%s4 + $0x5c] sm:$0xf]
  %v771 = vld [vmem:[%s4 + $0x60] sm:$0xf]
  %v772 = vld [vmem:[%s4 + $0x64] sm:$0xf]
  %v773 = vld [vmem:[%s4 + $0x68] sm:$0xf]
  %v774 = vld [vmem:[%s4 + $0x6c] sm:$0xf]
  %v775 = vld [vmem:[%s4 + $0x70] sm:$0xf]
  %v776 = vld [vmem:[%s4 + $0x74] sm:$0xf]
  %v777 = vld [vmem:[%s4 + $0x78] sm:$0xf]
  %v778 = vld [vmem:[%s4 + $0x7c] sm:$0xf]
  %v779 = vld [vmem:[%s4 + $0x80] sm:$0xf]
  %v780 = vld [vmem:[%s4 + $0x84] sm:$0xf]
  %v781 = vld [vmem:[%s4 + $0x88] sm:$0xf]
  %v782 = vld [vmem:[%s4 + $0x8c] sm:$0xf]
  %v783 = vld [vmem:[%s4 + $0x90] sm:$0xf]
  %v784 = vld [vmem:[%s4 + $0x94] sm:$0xf]
  %v785 = vld [vmem:[%s4 + $0x98] sm:$0xf]
  %v786 = vld [vmem:[%s4 + $0x9c] sm:$0xf]
  %v787 = vld [vmem:[%s4 + $0xa0] sm:$0xf]
  %v788 = vld [vmem:[%s4 + $0xa4] sm:$0xf]
  %v789 = vld [vmem:[%s4 + $0xa8] sm:$0xf]
  %v790 = vld [vmem:[%s4 + $0xac] sm:$0xf]
  %v791 = vld [vmem:[%s4 + $0xb0] sm:$0xf]
  %v792 = vld [vmem:[%s4 + $0xb4] sm:$0xf]
  %v793 = vld [vmem:[%s4 + $0xb8] sm:$0xf]
  %v794 = vld [vmem:[%s4 + $0xbc] sm:$0xf]
  %v795 = vld [vmem:[%s4 + $0xc0] sm:$0xf]
  %v796 = vld [vmem:[%s4 + $0xc4] sm:$0xf]
  %v797 = vld [vmem:[%s4 + $0xc8] sm:$0xf]
  %v798 = vld [vmem:[%s4 + $0xcc] sm:$0xf]
  %v799 = vld [vmem:[%s4 + $0xd0] sm:$0xf]
  %v800 = vld [vmem:[%s4 + $0xd4] sm:$0xf]
  %v801 = vld [vmem:[%s4 + $0xd8] sm:$0xf]
  %v802 = vld [vmem:[%s4 + $0xdc] sm:$0xf]
  %v803 = vld [vmem:[%s4 + $0xe0] sm:$0xf]
  %v804 = vld [vmem:[%s4 + $0xe4] sm:$0xf]
  %v805 = vld [vmem:[%s4 + $0xe8] sm:$0xf]
  %v806 = vld [vmem:[%s4 + $0xec] sm:$0xf]
  %v807 = vld [vmem:[%s4 + $0xf0] sm:$0xf]
  %v808 = vld [vmem:[%s4 + $0xf4] sm:$0xf]
  %v809 = vld [vmem:[%s4 + $0xf8] sm:$0xf]
  %v810 = vld [vmem:[%s4 + $0xfc] sm:$0xf]
  %v811 = vld [vmem:[%s4 + $0x100] sm:$0xf]
  %v812 = vld [vmem:[%s4 + $0x104] sm:$0xf]
  %v813 = vld [vmem:[%s4 + $0x108] sm:$0xf]
  %v814 = vld [vmem:[%s4 + $0x10c] sm:$0xf]
  %v815 = vld [vmem:[%s4 + $0x110] sm:$0xf]
  %v816 = vld [vmem:[%s4 + $0x114] sm:$0xf]
  %v817 = vld [vmem:[%s4 + $0x118] sm:$0xf]
  %v818 = vld [vmem:[%s4 + $0x11c] sm:$0xf]
  %v819 = vld [vmem:[%s4 + $0x120] sm:$0xf]
  %v820 = vld [vmem:[%s4 + $0x124] sm:$0xf]
  %v821 = vld [vmem:[%s4 + $0x128] sm:$0xf]
  %v822 = vld [vmem:[%s4 + $0x12c] sm:$0xf]
  %v823 = vld [vmem:[%s4 + $0x130] sm:$0xf]
  %v824 = vld [vmem:[%s4 + $0x134] sm:$0xf]
  %v825 = vld [vmem:[%s4 + $0x138] sm:$0xf]
  %v826 = vld [vmem:[%s4 + $0x13c] sm:$0xf]
  %v827 = vld [vmem:[%s4 + $0x140] sm:$0xf]
  %v828 = vld [vmem:[%s4 + $0x144] sm:$0xf]
  %v829 = vld [vmem:[%s4 + $0x148] sm:$0xf]
  %v830 = vld [vmem:[%s4 + $0x14c] sm:$0xf]
  %v831 = vld [vmem:[%s4 + $0x150] sm:$0xf]
  %v832 = vld [vmem:[%s4 + $0x154] sm:$0xf]
  %v833 = vld [vmem:[%s4 + $0x158] sm:$0xf]
  %v834 = vld [vmem:[%s4 + $0x15c] sm:$0xf]
  %v835 = vld [vmem:[%s4 + $0x160] sm:$0xf]
  %v836 = vld [vmem:[%s4 + $0x164] sm:$0xf]
  %v837 = vld [vmem:[%s4 + $0x168] sm:$0xf]
  %v838 = vld [vmem:[%s4 + $0x16c] sm:$0xf]
  %v839 = vld [vmem:[%s4 + $0x170] sm:$0xf]
  %v840 = vld [vmem:[%s4 + $0x174] sm:$0xf]
  %v841 = vld [vmem:[%s4 + $0x178] sm:$0xf]
  %v842 = vld [vmem:[%s4 + $0x17c] sm:$0xf]
  %v843 = vld [vmem:[%s5] sm:$0x1]
  %v845 = vlaneseq
  %v846 = vshrl.u32 %v845, 7
  %v847 = vsub.s32 0, %v846
  %v848 = vrot.slane %v843, %v847
  %v946 = vunpack.c.l.b16 %v747
  %v947 = vunpack.c.l.b16 %v748
  %v948 = vunpack.c.l.b16 %v749
  %v949 = vunpack.c.l.b16 %v750
  %v950 = vunpack.c.l.b16 %v751
  %v951 = vunpack.c.l.b16 %v752
  %v952 = vunpack.c.l.b16 %v753
  %v953 = vunpack.c.l.b16 %v754
  %v954 = vunpack.c.l.b16 %v755
  %v955 = vunpack.c.l.b16 %v756
  %v956 = vunpack.c.l.b16 %v757
  %v957 = vunpack.c.l.b16 %v758
  %v958 = vunpack.c.l.b16 %v759
  %v959 = vunpack.c.l.b16 %v760
  %v960 = vunpack.c.l.b16 %v761
  %v961 = vunpack.c.l.b16 %v762
  %v962 = vunpack.c.l.b16 %v763
  %v963 = vunpack.c.l.b16 %v764
  %v964 = vunpack.c.l.b16 %v765
  %v965 = vunpack.c.l.b16 %v766
  %v966 = vunpack.c.l.b16 %v767
  %v967 = vunpack.c.l.b16 %v768
  %v968 = vunpack.c.l.b16 %v769
  %v969 = vunpack.c.l.b16 %v770
  %v970 = vunpack.c.l.b16 %v771
  %v971 = vunpack.c.l.b16 %v772
  %v972 = vunpack.c.l.b16 %v773
  %v973 = vunpack.c.l.b16 %v774
  %v974 = vunpack.c.l.b16 %v775
  %v975 = vunpack.c.l.b16 %v776
  %v976 = vunpack.c.l.b16 %v777
  %v977 = vunpack.c.l.b16 %v778
  %v978 = vunpack.c.l.b16 %v779
  %v979 = vunpack.c.l.b16 %v780
  %v980 = vunpack.c.l.b16 %v781
  %v981 = vunpack.c.l.b16 %v782
  %v982 = vunpack.c.l.b16 %v783
  %v983 = vunpack.c.l.b16 %v784
  %v984 = vunpack.c.l.b16 %v785
  %v985 = vunpack.c.l.b16 %v786
  %v986 = vunpack.c.l.b16 %v787
  %v987 = vunpack.c.l.b16 %v788
  %v988 = vunpack.c.l.b16 %v789
  %v989 = vunpack.c.l.b16 %v790
  %v990 = vunpack.c.l.b16 %v791
  %v991 = vunpack.c.l.b16 %v792
  %v992 = vunpack.c.l.b16 %v793
  %v993 = vunpack.c.l.b16 %v794
  %v994 = vunpack.c.l.b16 %v795
  %v995 = vunpack.c.l.b16 %v796
  %v996 = vunpack.c.l.b16 %v797
  %v997 = vunpack.c.l.b16 %v798
  %v998 = vunpack.c.l.b16 %v799
  %v999 = vunpack.c.l.b16 %v800
  %v1000 = vunpack.c.l.b16 %v801
  %v1001 = vunpack.c.l.b16 %v802
  %v1002 = vunpack.c.l.b16 %v803
  %v1003 = vunpack.c.l.b16 %v804
  %v1004 = vunpack.c.l.b16 %v805
  %v1005 = vunpack.c.l.b16 %v806
  %v1006 = vunpack.c.l.b16 %v807
  %v1007 = vunpack.c.l.b16 %v808
  %v1008 = vunpack.c.l.b16 %v809
  %v1009 = vunpack.c.l.b16 %v810
  %v1010 = vunpack.c.l.b16 %v811
  %v1011 = vunpack.c.l.b16 %v812
  %v1012 = vunpack.c.l.b16 %v813
  %v1013 = vunpack.c.l.b16 %v814
  %v1014 = vunpack.c.l.b16 %v815
  %v1015 = vunpack.c.l.b16 %v816
  %v1016 = vunpack.c.l.b16 %v817
  %v1017 = vunpack.c.l.b16 %v818
  %v1018 = vunpack.c.l.b16 %v819
  %v1019 = vunpack.c.l.b16 %v820
  %v1020 = vunpack.c.l.b16 %v821
  %v1021 = vunpack.c.l.b16 %v822
  %v1022 = vunpack.c.l.b16 %v823
  %v1023 = vunpack.c.l.b16 %v824
  %v1024 = vunpack.c.l.b16 %v825
  %v1025 = vunpack.c.l.b16 %v826
  %v1026 = vunpack.c.l.b16 %v827
  %v1027 = vunpack.c.l.b16 %v828
  %v1028 = vunpack.c.l.b16 %v829
  %v1029 = vunpack.c.l.b16 %v830
  %v1030 = vunpack.c.l.b16 %v831
  %v1031 = vunpack.c.l.b16 %v832
  %v1032 = vunpack.c.l.b16 %v833
  %v1033 = vunpack.c.l.b16 %v834
  %v1034 = vunpack.c.l.b16 %v835
  %v1035 = vunpack.c.l.b16 %v836
  %v1036 = vunpack.c.l.b16 %v837
  %v1037 = vunpack.c.l.b16 %v838
  %v1038 = vunpack.c.l.b16 %v839
  %v1039 = vunpack.c.l.b16 %v840
  %v1040 = vunpack.c.l.b16 %v841
  %v1041 = vunpack.c.l.b16 %v842
  %v1042 = vpack.c.b16 %v947, %v946
  %v1043 = vpack.c.b16 %v949, %v948
  %v1044 = vpack.c.b16 %v951, %v950
  %v1045 = vpack.c.b16 %v953, %v952
  %v1046 = vpack.c.b16 %v955, %v954
  %v1047 = vpack.c.b16 %v957, %v956
  %v1048 = vpack.c.b16 %v959, %v958
  %v1049 = vpack.c.b16 %v961, %v960
  %v1050 = vpack.c.b16 %v963, %v962
  %v1051 = vpack.c.b16 %v965, %v964
  %v1052 = vpack.c.b16 %v967, %v966
  %v1053 = vpack.c.b16 %v969, %v968
  %v1054 = vpack.c.b16 %v971, %v970
  %v1055 = vpack.c.b16 %v973, %v972
  %v1056 = vpack.c.b16 %v975, %v974
  %v1057 = vpack.c.b16 %v977, %v976
  %v1058 = vpack.c.b16 %v979, %v978
  %v1059 = vpack.c.b16 %v981, %v980
  %v1060 = vpack.c.b16 %v983, %v982
  %v1061 = vpack.c.b16 %v985, %v984
  %v1062 = vpack.c.b16 %v987, %v986
  %v1063 = vpack.c.b16 %v989, %v988
  %v1064 = vpack.c.b16 %v991, %v990
  %v1065 = vpack.c.b16 %v993, %v992
  %v1066 = vpack.c.b16 %v995, %v994
  %v1067 = vpack.c.b16 %v997, %v996
  %v1068 = vpack.c.b16 %v999, %v998
  %v1069 = vpack.c.b16 %v1001, %v1000
  %v1070 = vpack.c.b16 %v1003, %v1002
  %v1071 = vpack.c.b16 %v1005, %v1004
  %v1072 = vpack.c.b16 %v1007, %v1006
  %v1073 = vpack.c.b16 %v1009, %v1008
  %v1074 = vpack.c.b16 %v1011, %v1010
  %v1075 = vpack.c.b16 %v1013, %v1012
  %v1076 = vpack.c.b16 %v1015, %v1014
  %v1077 = vpack.c.b16 %v1017, %v1016
  %v1078 = vpack.c.b16 %v1019, %v1018
  %v1079 = vpack.c.b16 %v1021, %v1020
  %v1080 = vpack.c.b16 %v1023, %v1022
  %v1081 = vpack.c.b16 %v1025, %v1024
  %v1082 = vpack.c.b16 %v1027, %v1026
  %v1083 = vpack.c.b16 %v1029, %v1028
  %v1084 = vpack.c.b16 %v1031, %v1030
  %v1085 = vpack.c.b16 %v1033, %v1032
  %v1086 = vpack.c.b16 %v1035, %v1034
  %v1087 = vpack.c.b16 %v1037, %v1036
  %v1088 = vpack.c.b16 %v1039, %v1038
  %v1089 = vpack.c.b16 %v1041, %v1040
  %1138 = vmatprep.subr.bf16.mxu0 0
  %1139 = vmatpush1.bf16.msra.mxu0 %v1042
  %1140 = vmatprep.subr.bf16.mxu0 0
  %1141 = vmatpush1.bf16.msra.mxu0 %v1043
  %1142 = vmatprep.subr.bf16.mxu0 0
  %1143 = vmatpush1.bf16.msra.mxu0 %v1044
  %1144 = vmatprep.subr.bf16.mxu0 0
  %1145 = vmatpush1.bf16.msra.mxu0 %v1045
  %1146 = vmatprep.subr.bf16.mxu0 0
  %1147 = vmatpush1.bf16.msra.mxu0 %v1046
  %1148 = vmatprep.subr.bf16.mxu0 0
  %1149 = vmatpush1.bf16.msra.mxu0 %v1047
  %1150 = vmatprep.subr.bf16.mxu0 0
  %1151 = vmatpush1.bf16.msra.mxu0 %v1048
  %1152 = vmatprep.subr.bf16.mxu0 0
  %1153 = vmatpush1.bf16.msra.mxu0 %v1049
  %1154 = vmatprep.subr.bf16.mxu0 0
  %1155 = vmatpush1.bf16.msra.mxu0 %v1050
  %1156 = vmatprep.subr.bf16.mxu0 0
  %1157 = vmatpush1.bf16.msra.mxu0 %v1051
  %1158 = vmatprep.subr.bf16.mxu0 0
  %1159 = vmatpush1.bf16.msra.mxu0 %v1052
  %1160 = vmatprep.subr.bf16.mxu0 0
  %1161 = vmatpush1.bf16.msra.mxu0 %v1053
  %1162 = vmatprep.subr.bf16.mxu0 0
  %1163 = vmatpush1.bf16.msra.mxu0 %v1054
  %1164 = vmatprep.subr.bf16.mxu0 0
  %1165 = vmatpush1.bf16.msra.mxu0 %v1055
  %1166 = vmatprep.subr.bf16.mxu0 0
  %1167 = vmatpush1.bf16.msra.mxu0 %v1056
  %1168 = vmatprep.subr.bf16.mxu0 0
  %1169 = vmatpush1.bf16.msra.mxu0 %v1057
  %1170 = vmatprep.mubr.bf16.mxu0 %v220
  %1171 = vmatmul.mubr.bf16.gmra.mrb[0].mxu0 %v219
  %v1172 = vpop.f32.mrb[0].mxu0
  %v1173 = vadd.f32 %v848, %v1172
  %v1174 = vpop.f32.mrb[0].mxu0
  %v1175 = vpop.f32.mrb[0].mxu0
  %v1176 = vadd.f32 %v848, %v1175
  %v1177 = vpop.f32.mrb[0].mxu0
  %1178 = vmatprep.mubr.bf16.mxu0 %v226
  %1179 = vmatmul.mubr.bf16.gmra.mrb[0].mxu0 %v225
  %v1180 = vpop.f32.mrb[0].mxu0
  %v1181 = vadd.f32 %v848, %v1180
  %v1182 = vpop.f32.mrb[0].mxu0
  %v1183 = vpop.f32.mrb[0].mxu0
  %v1184 = vadd.f32 %v848, %v1183
  %v1185 = vpop.f32.mrb[0].mxu0
  %1186 = vmatprep.mubr.bf16.mxu0 %v232
  %1187 = vmatmul.mubr.bf16.gmra.mrb[0].mxu0 %v231
  %v1188 = vpop.f32.mrb[0].mxu0
  %v1189 = vadd.f32 %v848, %v1188
  %v1190 = vpop.f32.mrb[0].mxu0
  %v1191 = vpop.f32.mrb[0].mxu0
  %v1192 = vadd.f32 %v848, %v1191
  %v1193 = vpop.f32.mrb[0].mxu0
  %1194 = vmatprep.mubr.bf16.mxu0 %v238
  %1195 = vmatmul.mubr.bf16.gmra.mrb[0].mxu0 %v237
  %v1196 = vpop.f32.mrb[0].mxu0
  %v1197 = vadd.f32 %v848, %v1196
  %v1198 = vpop.f32.mrb[0].mxu0
  %v1199 = vpop.f32.mrb[0].mxu0
  %v1200 = vpop.f32.mrb[0].mxu0
  %1201 = vdwg.mxu0
  %1202 = vmatprep.subr.bf16.mxu0 0
  %1203 = vmatpush1.bf16.msra.mxu0 %v1058
  %1204 = vmatprep.subr.bf16.mxu0 0
  %1205 = vmatpush1.bf16.msra.mxu0 %v1059
  %1206 = vmatprep.subr.bf16.mxu0 0
  %1207 = vmatpush1.bf16.msra.mxu0 %v1060
  %1208 = vmatprep.subr.bf16.mxu0 0
  %1209 = vmatpush1.bf16.msra.mxu0 %v1061
  %1210 = vmatprep.subr.bf16.mxu0 0
  %1211 = vmatpush1.bf16.msra.mxu0 %v1062
  %1212 = vmatprep.subr.bf16.mxu0 0
  %1213 = vmatpush1.bf16.msra.mxu0 %v1063
  %1214 = vmatprep.subr.bf16.mxu0 0
  %1215 = vmatpush1.bf16.msra.mxu0 %v1064
  %1216 = vmatprep.subr.bf16.mxu0 0
  %1217 = vmatpush1.bf16.msra.mxu0 %v1065
  %1218 = vmatprep.subr.bf16.mxu0 0
  %1219 = vmatpush1.bf16.msra.mxu0 %v1066
  %1220 = vmatprep.subr.bf16.mxu0 0
  %1221 = vmatpush1.bf16.msra.mxu0 %v1067
  %1222 = vmatprep.subr.bf16.mxu0 0
  %1223 = vmatpush1.bf16.msra.mxu0 %v1068
  %1224 = vmatprep.subr.bf16.mxu0 0
  %1225 = vmatpush1.bf16.msra.mxu0 %v1069
  %1226 = vmatprep.subr.bf16.mxu0 0
  %1227 = vmatpush1.bf16.msra.mxu0 %v1070
  %1228 = vmatprep.subr.bf16.mxu0 0
  %1229 = vmatpush1.bf16.msra.mxu0 %v1071
  %1230 = vmatprep.subr.bf16.mxu0 0
  %1231 = vmatpush1.bf16.msra.mxu0 %v1072
  %1232 = vmatprep.subr.bf16.mxu0 0
  %1233 = vmatpush1.bf16.msra.mxu0 %v1073
  %1234 = vmatprep.mubr.bf16.mxu0 %v222
  %1235 = vmatmul.mubr.bf16.gmra.mrb[0].mxu0 %v221
  %v1236 = vpop.f32.mrb[0].mxu0
  %v1237 = vadd.f32 %v1173, %v1236
  %v1238 = vpop.f32.mrb[0].mxu0
  %v1239 = vpop.f32.mrb[0].mxu0
  %v1240 = vadd.f32 %v1176, %v1239
  %v1241 = vpop.f32.mrb[0].mxu0
  %1242 = vmatprep.mubr.bf16.mxu0 %v228
  %1243 = vmatmul.mubr.bf16.gmra.mrb[0].mxu0 %v227
  %v1244 = vpop.f32.mrb[0].mxu0
  %v1245 = vadd.f32 %v1181, %v1244
  %v1246 = vpop.f32.mrb[0].mxu0
  %v1247 = vpop.f32.mrb[0].mxu0
  %v1248 = vadd.f32 %v1184, %v1247
  %v1249 = vpop.f32.mrb[0].mxu0
  %1250 = vmatprep.mubr.bf16.mxu0 %v234
  %1251 = vmatmul.mubr.bf16.gmra.mrb[0].mxu0 %v233
  %v1252 = vpop.f32.mrb[0].mxu0
  %v1253 = vadd.f32 %v1189, %v1252
  %v1254 = vpop.f32.mrb[0].mxu0
  %v1255 = vpop.f32.mrb[0].mxu0
  %v1256 = vadd.f32 %v1192, %v1255
  %v1257 = vpop.f32.mrb[0].mxu0
  %1258 = vmatprep.mubr.bf16.mxu0 %v240
  %1259 = vmatmul.mubr.bf16.gmra.mrb[0].mxu0 %v239
  %v1260 = vpop.f32.mrb[0].mxu0
  %v1261 = vadd.f32 %v1197, %v1260
  %v1262 = vpop.f32.mrb[0].mxu0
  %v1263 = vpop.f32.mrb[0].mxu0
  %v1264 = vpop.f32.mrb[0].mxu0
  %1265 = vdwg.mxu0
  %1266 = vmatprep.subr.bf16.mxu0 0
  %1267 = vmatpush1.bf16.msra.mxu0 %v1074
  %1268 = vmatprep.subr.bf16.mxu0 0
  %1269 = vmatpush1.bf16.msra.mxu0 %v1075
  %1270 = vmatprep.subr.bf16.mxu0 0
  %1271 = vmatpush1.bf16.msra.mxu0 %v1076
  %1272 = vmatprep.subr.bf16.mxu0 0
  %1273 = vmatpush1.bf16.msra.mxu0 %v1077
  %1274 = vmatprep.subr.bf16.mxu0 0
  %1275 = vmatpush1.bf16.msra.mxu0 %v1078
  %1276 = vmatprep.subr.bf16.mxu0 0
  %1277 = vmatpush1.bf16.msra.mxu0 %v1079
  %1278 = vmatprep.subr.bf16.mxu0 0
  %1279 = vmatpush1.bf16.msra.mxu0 %v1080
  %1280 = vmatprep.subr.bf16.mxu0 0
  %1281 = vmatpush1.bf16.msra.mxu0 %v1081
  %1282 = vmatprep.subr.bf16.mxu0 0
  %1283 = vmatpush1.bf16.msra.mxu0 %v1082
  %1284 = vmatprep.subr.bf16.mxu0 0
  %1285 = vmatpush1.bf16.msra.mxu0 %v1083
  %1286 = vmatprep.subr.bf16.mxu0 0
  %1287 = vmatpush1.bf16.msra.mxu0 %v1084
  %1288 = vmatprep.subr.bf16.mxu0 0
  %1289 = vmatpush1.bf16.msra.mxu0 %v1085
  %1290 = vmatprep.subr.bf16.mxu0 0
  %1291 = vmatpush1.bf16.msra.mxu0 %v1086
  %1292 = vmatprep.subr.bf16.mxu0 0
  %1293 = vmatpush1.bf16.msra.mxu0 %v1087
  %1294 = vmatprep.subr.bf16.mxu0 0
  %1295 = vmatpush1.bf16.msra.mxu0 %v1088
  %1296 = vmatprep.subr.bf16.mxu0 0
  %1297 = vmatpush1.bf16.msra.mxu0 %v1089
  %1298 = vmatprep.mubr.bf16.mxu0 %v224
  %1299 = vmatmul.mubr.bf16.gmra.mrb[0].mxu0 %v223
  %v1300 = vpop.f32.mrb[0].mxu0
  %v1301 = vadd.f32 %v1237, %v1300
  %v1302 = vpop.f32.mrb[0].mxu0
  %v1303 = vpop.f32.mrb[0].mxu0
  %v1304 = vadd.f32 %v1240, %v1303
  %v1305 = vpop.f32.mrb[0].mxu0
  %1306 = vmatprep.mubr.bf16.mxu0 %v230
  %1307 = vmatmul.mubr.bf16.gmra.mrb[0].mxu0 %v229
  %v1308 = vpop.f32.mrb[0].mxu0
  %v1309 = vadd.f32 %v1245, %v1308
  %v1310 = vpop.f32.mrb[0].mxu0
  %v1311 = vpop.f32.mrb[0].mxu0
  %v1312 = vadd.f32 %v1248, %v1311
  %v1313 = vpop.f32.mrb[0].mxu0
  %1314 = vmatprep.mubr.bf16.mxu0 %v236
  %1315 = vmatmul.mubr.bf16.gmra.mrb[0].mxu0 %v235
  %v1316 = vpop.f32.mrb[0].mxu0
  %v1317 = vadd.f32 %v1253, %v1316
  %v1318 = vpop.f32.mrb[0].mxu0
  %v1319 = vpop.f32.mrb[0].mxu0
  %v1320 = vadd.f32 %v1256, %v1319
  %v1321 = vpop.f32.mrb[0].mxu0
  %1322 = vmatprep.mubr.bf16.mxu0 %v242
  %1323 = vmatmul.mubr.bf16.gmra.mrb[0].mxu0 %v241
  %v1324 = vpop.f32.mrb[0].mxu0
  %v1325 = vadd.f32 %v1261, %v1324
  %v1326 = vpop.f32.mrb[0].mxu0
  %v1327 = vpop.f32.mrb[0].mxu0
  %v1328 = vpop.f32.mrb[0].mxu0
  %1329 = vdwg.mxu0
  %v1330 = vmax.f32 %v1301, -30.0
  %v1331 = vmax.f32 %v1304, -30.0
  %v1332 = vmax.f32 %v1309, -30.0
  %v1333 = vmax.f32 %v1312, -30.0
  %v1334 = vmax.f32 %v1317, -30.0
  %v1335 = vmax.f32 %v1320, -30.0
  %v1336 = vmax.f32 %v1325, -30.0
  %v1337 = vmin.f32 %v1330, 20.0
  %v1338 = vmin.f32 %v1331, 20.0
  %v1339 = vmin.f32 %v1332, 20.0
  %v1340 = vmin.f32 %v1333, 20.0
  %v1341 = vmin.f32 %v1334, 20.0
  %v1342 = vmin.f32 %v1335, 20.0
  %v1343 = vmin.f32 %v1336, 20.0
  %v1344 = vmul.f32 %v1337, 0.5
  %v1345 = vmul.f32 %v1338, 0.5
  %v1346 = vmul.f32 %v1339, 0.5
  %v1347 = vmul.f32 %v1340, 0.5
  %v1348 = vmul.f32 %v1341, 0.5
  %v1349 = vmul.f32 %v1342, 0.5
  %v1350 = vmul.f32 %v1343, 0.5
  %v1351 = vmul.f32 %v1344, 1.442695
  %v1352 = vpow.pop %v1351
  %v1353 = vmul.f32 %v1345, 1.442695
  %v1354 = vpow.pop %v1353
  %v1355 = vmul.f32 %v1346, 1.442695
  %v1356 = vpow.pop %v1355
  %v1357 = vmul.f32 %v1347, 1.442695
  %v1358 = vpow.pop %v1357
  %v1359 = vmul.f32 %v1348, 1.442695
  %v1360 = vpow.pop %v1359
  %v1361 = vmul.f32 %v1349, 1.442695
  %v1362 = vpow.pop %v1361
  %v1363 = vmul.f32 %v1350, 1.442695
  %v1364 = vpow.pop %v1363
  %v1365 = vmul.f32 %v1352, %v1352
  %v1366 = vmul.f32 %v1354, %v1354
  %v1367 = vmul.f32 %v1356, %v1356
  %v1368 = vmul.f32 %v1358, %v1358
  %v1369 = vmul.f32 %v1360, %v1360
  %v1370 = vmul.f32 %v1362, %v1362
  %v1371 = vmul.f32 %v1364, %v1364
  %v1372 = vld [vmem:[%s1] sm:$0xff]
  %v1373 = vld [vmem:[%s1 + $0x8] sm:$0xff]
  %v1374 = vld [vmem:[%s1 + $0x10] sm:$0xff]
  %v1375 = vld [vmem:[%s1 + $0x18] sm:$0xff]
  %v1376 = vld [vmem:[%s1 + $0x20] sm:$0xff]
  %v1377 = vld [vmem:[%s1 + $0x28] sm:$0xff]
  %v1378 = vld [vmem:[%s1 + $0x30] sm:$0xff]
  %v1379 = vmul.f32 %v1352, %v1372
  %v1380 = vmul.f32 %v1354, %v1373
  %v1381 = vmul.f32 %v1356, %v1374
  %v1382 = vmul.f32 %v1358, %v1375
  %v1383 = vmul.f32 %v1360, %v1376
  %v1384 = vmul.f32 %v1362, %v1377
  %v1385 = vmul.f32 %v1364, %v1378
  %v1386 = vadd.f32 %v718, %v1379
  %v1387 = vadd.f32 %v721, %v1380
  %v1388 = vadd.f32 %v726, %v1381
  %v1389 = vadd.f32 %v729, %v1382
  %v1390 = vadd.f32 %v734, %v1383
  %v1391 = vadd.f32 %v737, %v1384
  %v1392 = vadd.f32 %v742, %v1385
  %v1393 = vmul.f32 %v718, %v718
  %v1394 = vmul.f32 %v721, %v721
  %v1395 = vmul.f32 %v726, %v726
  %v1396 = vmul.f32 %v729, %v729
  %v1397 = vmul.f32 %v734, %v734
  %v1398 = vmul.f32 %v737, %v737
  %v1399 = vmul.f32 %v742, %v742
  %v1400 = vadd.f32 %v1393, %v1365
  %v1401 = vadd.f32 %v1394, %v1366
  %v1402 = vadd.f32 %v1395, %v1367
  %v1403 = vadd.f32 %v1396, %v1368
  %v1404 = vadd.f32 %v1397, %v1369
  %v1405 = vadd.f32 %v1398, %v1370
  %v1406 = vadd.f32 %v1399, %v1371
  %v1407 = vsub.f32 %v1400, 1.0
  %v1408 = vsub.f32 %v1401, 1.0
  %v1409 = vsub.f32 %v1402, 1.0
  %v1410 = vsub.f32 %v1403, 1.0
  %v1411 = vsub.f32 %v1404, 1.0
  %v1412 = vsub.f32 %v1405, 1.0
  %v1413 = vsub.f32 %v1406, 1.0
  %v1414 = vsub.f32 %v1407, %v1337
  %v1415 = vsub.f32 %v1408, %v1338
  %v1416 = vsub.f32 %v1409, %v1339
  %v1417 = vsub.f32 %v1410, %v1340
  %v1418 = vsub.f32 %v1411, %v1341
  %v1419 = vsub.f32 %v1412, %v1342
  %v1420 = vsub.f32 %v1413, %v1343
  %v1421 = vmul.f32 %v1414, 0.5
  %v1422 = vmul.f32 %v1415, 0.5
  %v1423 = vmul.f32 %v1416, 0.5
  %v1424 = vmul.f32 %v1417, 0.5
  %v1425 = vmul.f32 %v1418, 0.5
  %v1426 = vmul.f32 %v1419, 0.5
  %v1427 = vmul.f32 %v1420, 0.5
  %s1428 = smul.u32 0, 56
  %v1429 = vlaneseq
  %v1430 = vshrl.u32 %v1429, 7
  %v1431 = vadd.s32 %v1430, 8
  %v1432 = vadd.s32 %v1430, 16
  %v1433 = vadd.s32 %v1430, 24
  %v1434 = vadd.s32 %v1430, 32
  %v1435 = vadd.s32 %v1430, 40
  %v1436 = vadd.s32 %v1430, 48
  %v1437 = vstv %s1428
  %v1438 = vadd.s32 %v1437, %v1430
  %v1439 = vadd.s32 %v1437, %v1431
  %v1440 = vadd.s32 %v1437, %v1432
  %v1441 = vadd.s32 %v1437, %v1433
  %v1442 = vadd.s32 %v1437, %v1434
  %v1443 = vadd.s32 %v1437, %v1435
  %v1444 = vadd.s32 %v1437, %v1436
  %vm1445 = vcmp.lt.s32.totalorder %v1438, 50
  %vm1446 = vcmp.lt.s32.totalorder %v1439, 50
  %vm1447 = vcmp.lt.s32.totalorder %v1440, 50
  %vm1448 = vcmp.lt.s32.totalorder %v1441, 50
  %vm1449 = vcmp.lt.s32.totalorder %v1442, 50
  %vm1450 = vcmp.lt.s32.totalorder %v1443, 50
  %vm1451 = vcmp.lt.s32.totalorder %v1444, 50
  %v1452 = vsel %vm1445, %v1421, 0.0
  %v1453 = vsel %vm1446, %v1422, 0.0
  %v1454 = vsel %vm1447, %v1423, 0.0
  %v1455 = vsel %vm1448, %v1424, 0.0
  %v1456 = vsel %vm1449, %v1425, 0.0
  %v1457 = vsel %vm1450, %v1426, 0.0
  %v1458 = vsel %vm1451, %v1427, 0.0
  %vm1459 = vcmask 64512
  %v1460 = vsel %vm1459, %v1452, 0.0
  %v1461 = vsel %vm1459, %v1453, 0.0
  %v1462 = vadd.f32 %v1460, %v1461
  %v1463 = vsel %vm1459, %v1454, 0.0
  %v1464 = vadd.f32 %v1462, %v1463
  %v1465 = vsel %vm1459, %v1455, 0.0
  %v1466 = vadd.f32 %v1464, %v1465
  %v1467 = vsel %vm1459, %v1456, 0.0
  %v1468 = vadd.f32 %v1466, %v1467
  %v1469 = vsel %vm1459, %v1457, 0.0
  %v1470 = vadd.f32 %v1468, %v1469
  %v1471 = vsel %vm1459, %v1458, 0.0
  %v1472 = vadd.f32 %v1470, %v1471
  %1473 = vadd.xlane.f32.xlu0 %v1472
  %v1474 = vpop.xlane.xlu0 %1473
  %v1475 = vrot.slane %v1474, 4
  %v1476 = vadd.f32 %v1474, %v1475
  %v1477 = vrot.slane %v1476, 2
  %v1478 = vadd.f32 %v1476, %v1477
  %v1479 = vrot.slane %v1478, 1
  %v1480 = vadd.f32 %v1478, %v1479
  %s1481 = vtos %v1480
  %v1482 = vstv %s1481
  %1483 = vst [vmem:[%s9] sm:$0xff] %v1482
  %v1484 = vpack.c.bf16 %v1387, %v1386
  %v1485 = vpack.c.bf16 %v1389, %v1388
  %v1486 = vpack.c.bf16 %v1391, %v1390
  %v1487 = vpack.c.bf16 %v1392, %v1392
  %v1488 = vld [vmem:[%s6] sm:$0xff]
  %v1489 = vld [vmem:[%s6 + $0x8] sm:$0xff]
  %v1490 = vld [vmem:[%s6 + $0x10] sm:$0xff]
  %v1491 = vld [vmem:[%s7] sm:$0x3f]
  %v1493 = vlaneseq
  %v1494 = vshrl.u32 %v1493, 7
  %v1495 = vsub.s32 0, %v1494
  %v1496 = vrot.slane %v1491, %v1495
  %v1497 = vlaneseq
  %v1498 = vshrl.u32 %v1497, 7
  %v1499 = vsub.s32 1, %v1498
  %v1500 = vrot.slane %v1491, %v1499
  %v1501 = vlaneseq
  %v1502 = vshrl.u32 %v1501, 7
  %v1503 = vsub.s32 2, %v1502
  %v1504 = vrot.slane %v1491, %v1503
  %v1505 = vlaneseq
  %v1506 = vshrl.u32 %v1505, 7
  %v1507 = vsub.s32 3, %v1506
  %v1508 = vrot.slane %v1491, %v1507
  %v1509 = vlaneseq
  %v1510 = vshrl.u32 %v1509, 7
  %v1511 = vsub.s32 4, %v1510
  %v1512 = vrot.slane %v1491, %v1511
  %v1513 = vlaneseq
  %v1514 = vshrl.u32 %v1513, 7
  %v1515 = vsub.s32 5, %v1514
  %v1516 = vrot.slane %v1491, %v1515
  %v1526 = vunpack.c.l.b16 %v1488
  %v1527 = vunpack.c.h.b16 %v1488
  %v1528 = vunpack.c.l.b16 %v1489
  %v1529 = vunpack.c.h.b16 %v1489
  %v1530 = vunpack.c.l.b16 %v1490
  %v1531 = vunpack.c.h.b16 %v1490
  %v1532 = vpack.c.b16 %v1526, %v1526
  %v1533 = vpack.c.b16 %v1527, %v1527
  %v1534 = vpack.c.b16 %v1528, %v1528
  %v1535 = vpack.c.b16 %v1529, %v1529
  %v1536 = vpack.c.b16 %v1530, %v1530
  %v1537 = vpack.c.b16 %v1531, %v1531
  %v1539 = vsel %vm1459, %v1484, 0
  %v1542 = vsel %vm1459, %v1485, 0
  %v1545 = vsel %vm1459, %v1486, 0
  %v1548 = vsel %vm1459, %v1487, 0
  %vm1550 = vcmask 1043456
  %v1552 = vsel %vm1550, %v1532, 0
  %v1555 = vsel %vm1550, %v1533, 0
  %v1558 = vsel %vm1550, %v1534, 0
  %v1561 = vsel %vm1550, %v1535, 0
  %v1564 = vsel %vm1550, %v1536, 0
  %v1567 = vsel %vm1550, %v1537, 0
  %1569 = vmatprep.subr.bf16.mxu0 %v1555
  %1570 = vmatpush1.bf16.msra.mxu0 %v1552
  %1571 = vmatprep.subr.bf16.mxu0 0
  %1572 = vmatpush1.bf16.msra.mxu0 0
  %1573 = vmatprep.subr.bf16.mxu0 0
  %1574 = vmatpush1.bf16.msra.mxu0 0
  %1575 = vmatprep.subr.bf16.mxu0 0
  %1576 = vmatpush1.bf16.msra.mxu0 0
  %1577 = vmatprep.subr.bf16.mxu0 0
  %1578 = vmatpush1.bf16.msra.mxu0 0
  %1579 = vmatprep.subr.bf16.mxu0 0
  %1580 = vmatpush1.bf16.msra.mxu0 0
  %1581 = vmatprep.subr.bf16.mxu0 0
  %1582 = vmatpush1.bf16.msra.mxu0 0
  %1583 = vmatprep.subr.bf16.mxu0 0
  %1584 = vmatpush1.bf16.msra.mxu0 0
  %1585 = vmatprep.subr.bf16.mxu0 0
  %1586 = vmatpush1.bf16.msra.mxu0 0
  %1587 = vmatprep.subr.bf16.mxu0 0
  %1588 = vmatpush1.bf16.msra.mxu0 0
  %1589 = vmatprep.subr.bf16.mxu0 0
  %1590 = vmatpush1.bf16.msra.mxu0 0
  %1591 = vmatprep.subr.bf16.mxu0 0
  %1592 = vmatpush1.bf16.msra.mxu0 0
  %1593 = vmatprep.subr.bf16.mxu0 0
  %1594 = vmatpush1.bf16.msra.mxu0 0
  %1595 = vmatprep.subr.bf16.mxu0 0
  %1596 = vmatpush1.bf16.msra.mxu0 0
  %1597 = vmatprep.subr.bf16.mxu0 0
  %1598 = vmatpush1.bf16.msra.mxu0 0
  %1599 = vmatprep.subr.bf16.mxu0 0
  %1600 = vmatpush1.bf16.msra.mxu0 0
  %1601 = vmatprep.mubr.bf16.mxu0 0
  %1602 = vmatmul.mubr.bf16.gmra.mrb[0].mxu0 %v1539
  %v1603 = vpop.f32.mrb[0].mxu0
  %v1604 = vadd.f32 %v1496, %v1603
  %v1605 = vpop.f32.mrb[0].mxu0
  %v1606 = vadd.f32 %v1500, %v1605
  %v1607 = vpop.f32.mrb[0].mxu0
  %v1608 = vadd.f32 %v1496, %v1607
  %v1609 = vpop.f32.mrb[0].mxu0
  %v1610 = vadd.f32 %v1500, %v1609
  %1611 = vmatprep.mubr.bf16.mxu0 0
  %1612 = vmatmul.mubr.bf16.gmra.mrb[0].mxu0 %v1542
  %v1613 = vpop.f32.mrb[0].mxu0
  %v1614 = vadd.f32 %v1496, %v1613
  %v1615 = vpop.f32.mrb[0].mxu0
  %v1616 = vadd.f32 %v1500, %v1615
  %v1617 = vpop.f32.mrb[0].mxu0
  %v1618 = vadd.f32 %v1496, %v1617
  %v1619 = vpop.f32.mrb[0].mxu0
  %v1620 = vadd.f32 %v1500, %v1619
  %1621 = vmatprep.mubr.bf16.mxu0 0
  %1622 = vmatmul.mubr.bf16.gmra.mrb[0].mxu0 %v1545
  %v1623 = vpop.f32.mrb[0].mxu0
  %v1624 = vadd.f32 %v1496, %v1623
  %v1625 = vpop.f32.mrb[0].mxu0
  %v1626 = vadd.f32 %v1500, %v1625
  %v1627 = vpop.f32.mrb[0].mxu0
  %v1628 = vadd.f32 %v1496, %v1627
  %v1629 = vpop.f32.mrb[0].mxu0
  %v1630 = vadd.f32 %v1500, %v1629
  %1631 = vmatprep.mubr.bf16.mxu0 0
  %1632 = vmatmul.mubr.bf16.gmra.mrb[0].mxu0 %v1548
  %v1633 = vpop.f32.mrb[0].mxu0
  %v1634 = vadd.f32 %v1496, %v1633
  %v1635 = vpop.f32.mrb[0].mxu0
  %v1636 = vadd.f32 %v1500, %v1635
  %v1637 = vpop.f32.mrb[0].mxu0
  %v1638 = vpop.f32.mrb[0].mxu0
  %1639 = vdwg.mxu0
  %1640 = vmatprep.subr.bf16.mxu0 %v1561
  %1641 = vmatpush1.bf16.msra.mxu0 %v1558
  %1642 = vmatprep.subr.bf16.mxu0 0
  %1643 = vmatpush1.bf16.msra.mxu0 0
  %1644 = vmatprep.subr.bf16.mxu0 0
  %1645 = vmatpush1.bf16.msra.mxu0 0
  %1646 = vmatprep.subr.bf16.mxu0 0
  %1647 = vmatpush1.bf16.msra.mxu0 0
  %1648 = vmatprep.subr.bf16.mxu0 0
  %1649 = vmatpush1.bf16.msra.mxu0 0
  %1650 = vmatprep.subr.bf16.mxu0 0
  %1651 = vmatpush1.bf16.msra.mxu0 0
  %1652 = vmatprep.subr.bf16.mxu0 0
  %1653 = vmatpush1.bf16.msra.mxu0 0
  %1654 = vmatprep.subr.bf16.mxu0 0
  %1655 = vmatpush1.bf16.msra.mxu0 0
  %1656 = vmatprep.subr.bf16.mxu0 0
  %1657 = vmatpush1.bf16.msra.mxu0 0
  %1658 = vmatprep.subr.bf16.mxu0 0
  %1659 = vmatpush1.bf16.msra.mxu0 0
  %1660 = vmatprep.subr.bf16.mxu0 0
  %1661 = vmatpush1.bf16.msra.mxu0 0
  %1662 = vmatprep.subr.bf16.mxu0 0
  %1663 = vmatpush1.bf16.msra.mxu0 0
  %1664 = vmatprep.subr.bf16.mxu0 0
  %1665 = vmatpush1.bf16.msra.mxu0 0
  %1666 = vmatprep.subr.bf16.mxu0 0
  %1667 = vmatpush1.bf16.msra.mxu0 0
  %1668 = vmatprep.subr.bf16.mxu0 0
  %1669 = vmatpush1.bf16.msra.mxu0 0
  %1670 = vmatprep.subr.bf16.mxu0 0
  %1671 = vmatpush1.bf16.msra.mxu0 0
  %1672 = vmatprep.mubr.bf16.mxu0 0
  %1673 = vmatmul.mubr.bf16.gmra.mrb[0].mxu0 %v1539
  %v1674 = vpop.f32.mrb[0].mxu0
  %v1675 = vadd.f32 %v1504, %v1674
  %v1676 = vpop.f32.mrb[0].mxu0
  %v1677 = vadd.f32 %v1508, %v1676
  %v1678 = vpop.f32.mrb[0].mxu0
  %v1679 = vadd.f32 %v1504, %v1678
  %v1680 = vpop.f32.mrb[0].mxu0
  %v1681 = vadd.f32 %v1508, %v1680
  %1682 = vmatprep.mubr.bf16.mxu0 0
  %1683 = vmatmul.mubr.bf16.gmra.mrb[0].mxu0 %v1542
  %v1684 = vpop.f32.mrb[0].mxu0
  %v1685 = vadd.f32 %v1504, %v1684
  %v1686 = vpop.f32.mrb[0].mxu0
  %v1687 = vadd.f32 %v1508, %v1686
  %v1688 = vpop.f32.mrb[0].mxu0
  %v1689 = vadd.f32 %v1504, %v1688
  %v1690 = vpop.f32.mrb[0].mxu0
  %v1691 = vadd.f32 %v1508, %v1690
  %1692 = vmatprep.mubr.bf16.mxu0 0
  %1693 = vmatmul.mubr.bf16.gmra.mrb[0].mxu0 %v1545
  %v1694 = vpop.f32.mrb[0].mxu0
  %v1695 = vadd.f32 %v1504, %v1694
  %v1696 = vpop.f32.mrb[0].mxu0
  %v1697 = vadd.f32 %v1508, %v1696
  %v1698 = vpop.f32.mrb[0].mxu0
  %v1699 = vadd.f32 %v1504, %v1698
  %v1700 = vpop.f32.mrb[0].mxu0
  %v1701 = vadd.f32 %v1508, %v1700
  %1702 = vmatprep.mubr.bf16.mxu0 0
  %1703 = vmatmul.mubr.bf16.gmra.mrb[0].mxu0 %v1548
  %v1704 = vpop.f32.mrb[0].mxu0
  %v1705 = vadd.f32 %v1504, %v1704
  %v1706 = vpop.f32.mrb[0].mxu0
  %v1707 = vadd.f32 %v1508, %v1706
  %v1708 = vpop.f32.mrb[0].mxu0
  %v1709 = vpop.f32.mrb[0].mxu0
  %1710 = vdwg.mxu0
  %1711 = vmatprep.subr.bf16.mxu0 %v1567
  %1712 = vmatpush1.bf16.msra.mxu0 %v1564
  %1713 = vmatprep.subr.bf16.mxu0 0
  %1714 = vmatpush1.bf16.msra.mxu0 0
  %1715 = vmatprep.subr.bf16.mxu0 0
  %1716 = vmatpush1.bf16.msra.mxu0 0
  %1717 = vmatprep.subr.bf16.mxu0 0
  %1718 = vmatpush1.bf16.msra.mxu0 0
  %1719 = vmatprep.subr.bf16.mxu0 0
  %1720 = vmatpush1.bf16.msra.mxu0 0
  %1721 = vmatprep.subr.bf16.mxu0 0
  %1722 = vmatpush1.bf16.msra.mxu0 0
  %1723 = vmatprep.subr.bf16.mxu0 0
  %1724 = vmatpush1.bf16.msra.mxu0 0
  %1725 = vmatprep.subr.bf16.mxu0 0
  %1726 = vmatpush1.bf16.msra.mxu0 0
  %1727 = vmatprep.subr.bf16.mxu0 0
  %1728 = vmatpush1.bf16.msra.mxu0 0
  %1729 = vmatprep.subr.bf16.mxu0 0
  %1730 = vmatpush1.bf16.msra.mxu0 0
  %1731 = vmatprep.subr.bf16.mxu0 0
  %1732 = vmatpush1.bf16.msra.mxu0 0
  %1733 = vmatprep.subr.bf16.mxu0 0
  %1734 = vmatpush1.bf16.msra.mxu0 0
  %1735 = vmatprep.subr.bf16.mxu0 0
  %1736 = vmatpush1.bf16.msra.mxu0 0
  %1737 = vmatprep.subr.bf16.mxu0 0
  %1738 = vmatpush1.bf16.msra.mxu0 0
  %1739 = vmatprep.subr.bf16.mxu0 0
  %1740 = vmatpush1.bf16.msra.mxu0 0
  %1741 = vmatprep.subr.bf16.mxu0 0
  %1742 = vmatpush1.bf16.msra.mxu0 0
  %1743 = vmatprep.mubr.bf16.mxu0 0
  %1744 = vmatmul.mubr.bf16.gmra.mrb[0].mxu0 %v1539
  %v1745 = vpop.f32.mrb[0].mxu0
  %v1746 = vadd.f32 %v1512, %v1745
  %v1747 = vpop.f32.mrb[0].mxu0
  %v1748 = vadd.f32 %v1516, %v1747
  %v1749 = vpop.f32.mrb[0].mxu0
  %v1750 = vadd.f32 %v1512, %v1749
  %v1751 = vpop.f32.mrb[0].mxu0
  %v1752 = vadd.f32 %v1516, %v1751
  %1753 = vmatprep.mubr.bf16.mxu0 0
  %1754 = vmatmul.mubr.bf16.gmra.mrb[0].mxu0 %v1542
  %v1755 = vpop.f32.mrb[0].mxu0
  %v1756 = vadd.f32 %v1512, %v1755
  %v1757 = vpop.f32.mrb[0].mxu0
  %v1758 = vadd.f32 %v1516, %v1757
  %v1759 = vpop.f32.mrb[0].mxu0
  %v1760 = vadd.f32 %v1512, %v1759
  %v1761 = vpop.f32.mrb[0].mxu0
  %v1762 = vadd.f32 %v1516, %v1761
  %1763 = vmatprep.mubr.bf16.mxu0 0
  %1764 = vmatmul.mubr.bf16.gmra.mrb[0].mxu0 %v1545
  %v1765 = vpop.f32.mrb[0].mxu0
  %v1766 = vadd.f32 %v1512, %v1765
  %v1767 = vpop.f32.mrb[0].mxu0
  %v1768 = vadd.f32 %v1516, %v1767
  %v1769 = vpop.f32.mrb[0].mxu0
  %v1770 = vadd.f32 %v1512, %v1769
  %v1771 = vpop.f32.mrb[0].mxu0
  %v1772 = vadd.f32 %v1516, %v1771
  %1773 = vmatprep.mubr.bf16.mxu0 0
  %1774 = vmatmul.mubr.bf16.gmra.mrb[0].mxu0 %v1548
  %v1775 = vpop.f32.mrb[0].mxu0
  %v1776 = vadd.f32 %v1512, %v1775
  %v1777 = vpop.f32.mrb[0].mxu0
  %v1778 = vadd.f32 %v1516, %v1777
  %v1779 = vpop.f32.mrb[0].mxu0
  %v1780 = vpop.f32.mrb[0].mxu0
  %1781 = vdwg.mxu0
  %1782 = vst [vmem:[%s8] sm:$0xff] %v1604
  %1783 = vst [vmem:[%s8 + $0x8] sm:$0xff] %v1606
  %1784 = vst [vmem:[%s8 + $0x10] sm:$0xff] %v1675
  %1785 = vst [vmem:[%s8 + $0x18] sm:$0xff] %v1677
  %1786 = vst [vmem:[%s8 + $0x20] sm:$0xff] %v1746
  %1787 = vst [vmem:[%s8 + $0x28] sm:$0xff] %v1748
  %1788 = vst [vmem:[%s8 + $0x30] sm:$0xff] %v1608
  %1789 = vst [vmem:[%s8 + $0x38] sm:$0xff] %v1610
  %1790 = vst [vmem:[%s8 + $0x40] sm:$0xff] %v1679
  %1791 = vst [vmem:[%s8 + $0x48] sm:$0xff] %v1681
  %1792 = vst [vmem:[%s8 + $0x50] sm:$0xff] %v1750
  %1793 = vst [vmem:[%s8 + $0x58] sm:$0xff] %v1752
  %1794 = vst [vmem:[%s8 + $0x60] sm:$0xff] %v1614
  %1795 = vst [vmem:[%s8 + $0x68] sm:$0xff] %v1616
  %1796 = vst [vmem:[%s8 + $0x70] sm:$0xff] %v1685
  %1797 = vst [vmem:[%s8 + $0x78] sm:$0xff] %v1687
  %1798 = vst [vmem:[%s8 + $0x80] sm:$0xff] %v1756
  %1799 = vst [vmem:[%s8 + $0x88] sm:$0xff] %v1758
  %1800 = vst [vmem:[%s8 + $0x90] sm:$0xff] %v1618
  %1801 = vst [vmem:[%s8 + $0x98] sm:$0xff] %v1620
  %1802 = vst [vmem:[%s8 + $0xa0] sm:$0xff] %v1689
  %1803 = vst [vmem:[%s8 + $0xa8] sm:$0xff] %v1691
  %1804 = vst [vmem:[%s8 + $0xb0] sm:$0xff] %v1760
  %1805 = vst [vmem:[%s8 + $0xb8] sm:$0xff] %v1762
  %1806 = vst [vmem:[%s8 + $0xc0] sm:$0xff] %v1624
  %1807 = vst [vmem:[%s8 + $0xc8] sm:$0xff] %v1626
  %1808 = vst [vmem:[%s8 + $0xd0] sm:$0xff] %v1695
  %1809 = vst [vmem:[%s8 + $0xd8] sm:$0xff] %v1697
  %1810 = vst [vmem:[%s8 + $0xe0] sm:$0xff] %v1766
  %1811 = vst [vmem:[%s8 + $0xe8] sm:$0xff] %v1768
  %1812 = vst [vmem:[%s8 + $0xf0] sm:$0xff] %v1628
  %1813 = vst [vmem:[%s8 + $0xf8] sm:$0xff] %v1630
  %1814 = vst [vmem:[%s8 + $0x100] sm:$0xff] %v1699
  %1815 = vst [vmem:[%s8 + $0x108] sm:$0xff] %v1701
  %1816 = vst [vmem:[%s8 + $0x110] sm:$0xff] %v1770
  %1817 = vst [vmem:[%s8 + $0x118] sm:$0xff] %v1772
  %1818 = vst [vmem:[%s8 + $0x120] sm:$0xff] %v1634
  %1819 = vst [vmem:[%s8 + $0x128] sm:$0xff] %v1636
  %1820 = vst [vmem:[%s8 + $0x130] sm:$0xff] %v1705
  %1821 = vst [vmem:[%s8 + $0x138] sm:$0xff] %v1707
  %1822 = vst [vmem:[%s8 + $0x140] sm:$0xff] %v1776
  %1823 = vst [vmem:[%s8 + $0x148] sm:$0xff] %v1778
  // Predicated region
  $region34: #{kl_model_forward.1} parent=0 // pred_check
    _
  $region35: #{kl_model_forward.1} parent=0 // pred_check_branch
    %1825 = sbr.rel (0) target = $region37
  $region36: #{kl_model_forward.1} parent=0 // pred_region
    _
  $region37: #{kl_model_forward.1} parent=0 // pred_fallthru
    _
  // Predicated region
  $region38: #{kl_model_forward.1} parent=0 // pred_check
    _
  $region39: #{kl_model_forward.1} parent=0 // pred_check_branch
    %1827 = sbr.rel (0) target = $region41
  $region40: #{kl_model_forward.1} parent=0 // pred_region
    _
  $region41: #{kl_model_forward.1} parent=0 // pred_fallthru
    _
  // Predicated region
  $region42: #{kl_model_forward.1} parent=0 // pred_check
    _
  $region43: #{kl_model_forward.1} parent=0 // pred_check_branch
    %1829 = sbr.rel (0) target = $region45
  $region44: #{kl_model_forward.1} parent=0 // pred_region
    _
  $region45: #{kl_model_forward.1} parent=0 // pred_fallthru
    _
  // Predicated region
  $region46: #{kl_model_forward.1} parent=0 // pred_check
    _
  $region47: #{kl_model_forward.1} parent=0 // pred_check_branch
    %1831 = sbr.rel (0) target = $region49
  $region48: #{kl_model_forward.1} parent=0 // pred_region
    _
  $region49: #{kl_model_forward.1} parent=0 // pred_fallthru
    _

</llo_original>
